<compile_context>
chip_gen: v5e
topology: v5e:2x2
jax: 0.10.0
libtpu: 0.0.40
codegen_flags: <defaults>
</compile_context>

<pallas_src>
import functools

import jax
import jax.numpy as jnp
from jax import lax
from jax.experimental import pallas as pl
from jax.experimental.pallas import tpu as pltpu


# ----------------------------------------------------------------------------
# Fused kernel: one (batch, time-tile) step of
#   conv1(s=1)+BN+ReLU  ->  conv2(s=2)+BN+ReLU  ->  Linear projection
# ----------------------------------------------------------------------------
def _fused_subsample_kernel(xe_ref, xo_ref, w1_ref, s1_ref, t1_ref,
                            w2_ref, s2_ref, t2_ref, wp_ref, bp_ref,
                            o_ref, h1_scr, *, K, tt_out, n_p):
    # xe_ref/xo_ref: (n_xp, C_in) bf16   even / odd x rows of this tile's halo window
    # w1_ref: (K, C_in, C2) bf16         conv1 taps
    # w2_ref: (Mt, 2*C2, C4) bf16        conv2 merged-pair taps [w2[2m]; w2[2m+1]]
    # wp_ref: (C4, D) bf16; bp_ref: (1, D) f32
    # s*/t* : (1, ch) f32                folded BN scale / (BN shift + conv bias)
    # o_ref : (tt_out, D);  h1_scr: (n_p, 2*C2) bf16 VMEM scratch
    f32 = jnp.float32
    C2 = s1_ref.shape[-1]
    C4 = s2_ref.shape[-1]
    Mt = (K + 1) // 2

    # ---- conv1 (stride 1), polyphase: h1_even / h1_odd as K per-tap matmuls off the refs -----
    acc_e = jnp.zeros((n_p, C2), f32)
    acc_o = jnp.zeros((n_p, C2), f32)
    for k in range(K):                          # static, unrolled taps
        wk = w1_ref[k]                          # (C_in, C2) bf16
        m = k // 2
        if k % 2 == 0:
            acc_e += jnp.dot(xe_ref[pl.ds(m, n_p), :], wk, preferred_element_type=f32)
            acc_o += jnp.dot(xo_ref[pl.ds(m, n_p), :], wk, preferred_element_type=f32)
        else:
            acc_e += jnp.dot(xo_ref[pl.ds(m, n_p), :], wk, preferred_element_type=f32)
            acc_o += jnp.dot(xe_ref[pl.ds(m + 1, n_p), :], wk, preferred_element_type=f32)

    # folded BN1(+conv bias) + ReLU; both phases stored side-by-side (lane-dense 2*C2) as bf16
    h1e = jnp.maximum(acc_e * s1_ref[...] + t1_ref[...], 0.0)
    h1o = jnp.maximum(acc_o * s1_ref[...] + t1_ref[...], 0.0)
    h1_scr[...] = jnp.concatenate([h1e, h1o], axis=-1).astype(h1_scr.dtype)

    # conv2's causal left-pad: h1 rows with negative global time index must be exactly zero.
    # Only the first time tile has such rows -> tiny static stores under pl.when.
    n_ze, n_zo = K // 2, (K - 1) // 2
    if n_ze or n_zo:
        @pl.when(pl.program_id(1) == 0)
        def _zero_causal_prefix():
            if n_ze == n_zo:
                h1_scr[pl.ds(0, n_ze), :] = jnp.zeros((n_ze, 2 * C2), h1_scr.dtype)
            else:
                if n_ze:
                    h1_scr[pl.ds(0, n_ze), pl.ds(0, C2)] = jnp.zeros((n_ze, C2), h1_scr.dtype)
                if n_zo:
                    h1_scr[pl.ds(0, n_zo), pl.ds(C2, C2)] = jnp.zeros((n_zo, C2), h1_scr.dtype)

    # ---- conv2 (stride 2) + folded BN + ReLU: Mt merged-pair taps over the lane-dense scratch
    acc2 = jnp.zeros((tt_out, C4), f32)
    for m in range(Mt):
        acc2 += jnp.dot(h1_scr[pl.ds(m, tt_out), :], w2_ref[m], preferred_element_type=f32)
    h2 = jnp.maximum(acc2 * s2_ref[...] + t2_ref[...], 0.0)

    # ---- final Linear projection (h2 never leaves VMEM) --------------------------------------
    y = jnp.dot(h2.astype(wp_ref.dtype), wp_ref[...], preferred_element_type=f32) + bp_ref[...]
    o_ref[...] = y.astype(o_ref.dtype)


def _round_up(v, m):
    return (v + m - 1) // m * m


# ----------------------------------------------------------------------------
# Wrapper: mask + even/odd phase split + halo windowing + bf16 weight prep are
# one fused XLA pass over small tensors; everything else runs in the kernel.
# ----------------------------------------------------------------------------
def cnn_subsampling_forward(params, x, mask_pad, kernel_size=5, max_time_tile=256):
    """x: (B, T, enc_out_dim) f32; mask_pad: (B, 1, T) bool.
    Returns (y, mask_pad[:, :, ::2]) with y: (B, ceil(T/2), llm_embed_dim)."""
    assert max_time_tile % 8 == 0
    B, T, C_in = x.shape
    K = kernel_size
    C2 = params["scale1"].shape[-1]
    C4 = params["scale2"].shape[-1]
    D = params["wp"].shape[-1]
    Mt = (K + 1) // 2

    # --- time tiling (output frames per grid step) --------------------------------------------
    t_out2 = (T + 1) // 2
    tt_out = min(_round_up(t_out2, 8), max_time_tile)
    nt = pl.cdiv(t_out2, tt_out)
    if B * nt == 1 and t_out2 > 8:              # v7x megacore: give both TensorCores work
        tt_out = _round_up(pl.cdiv(t_out2, 2), 8)
        nt = pl.cdiv(t_out2, tt_out)
    t_out2_pad = nt * tt_out

    n_p = _round_up(tt_out + Mt - 1, 8)         # h1 rows per phase computed per tile
    n_xp = _round_up(n_p + K // 2, 8)           # x rows per phase (incl. conv halo) per tile

    # --- mask (also kills 0*NaN), even/odd split, causal pad, per-tile halo windows -----------
    xm = jnp.where(mask_pad.transpose(0, 2, 1), x, 0.0)
    Q = (nt - 1) * tt_out + n_xp
    xe_full = jnp.pad(xm[:, 0::2, :], ((0, 0), (K - 1, Q - (K - 1) - (T + 1) // 2), (0, 0)))
    xo_full = jnp.pad(xm[:, 1::2, :], ((0, 0), (K - 1, Q - (K - 1) - T // 2), (0, 0)))
    xe_win = jnp.stack([xe_full[:, j * tt_out: j * tt_out + n_xp, :] for j in range(nt)],
                       axis=1).astype(jnp.bfloat16)         # (B, nt, n_xp, C_in)
    xo_win = jnp.stack([xo_full[:, j * tt_out: j * tt_out + n_xp, :] for j in range(nt)],
                       axis=1).astype(jnp.bfloat16)

    # --- weight prep (once): bf16 MXU operands, conv bias folded into BN shift ----------------
    w1b = params["w1"].astype(jnp.bfloat16)                               # (K, C_in, C2)
    shift1 = params["b1"] * params["scale1"] + params["shift1"]           # (1, C2) f32
    shift2 = params["b2"] * params["scale2"] + params["shift2"]           # (1, C4) f32
    w2 = params["w2"]
    if 2 * Mt > K:                                                        # dummy odd tap (K odd)
        w2 = jnp.concatenate([w2, jnp.zeros((2 * Mt - K, C2, C4), w2.dtype)], axis=0)
    w2m = w2.reshape(Mt, 2 * C2, C4).astype(jnp.bfloat16)                 # merged-pair taps
    wpb = params["wp"].astype(jnp.bfloat16)

    kern = functools.partial(_fused_subsample_kernel, K=K, tt_out=tt_out, n_p=n_p)
    out = pl.pallas_call(
        kern,
        out_shape=jax.ShapeDtypeStruct((B, t_out2_pad, D), x.dtype),
        grid=(B, nt),
        in_specs=[
            pl.BlockSpec((None, None, n_xp, C_in), lambda b, j: (b, j, 0, 0)),  # xe halo window
            pl.BlockSpec((None, None, n_xp, C_in), lambda b, j: (b, j, 0, 0)),  # xo halo window
            pl.BlockSpec((K, C_in, C2), lambda b, j: (0, 0, 0)),
            pl.BlockSpec((1, C2), lambda b, j: (0, 0)),
            pl.BlockSpec((1, C2), lambda b, j: (0, 0)),
            pl.BlockSpec((Mt, 2 * C2, C4), lambda b, j: (0, 0, 0)),
            pl.BlockSpec((1, C4), lambda b, j: (0, 0)),
            pl.BlockSpec((1, C4), lambda b, j: (0, 0)),
            pl.BlockSpec((C4, D), lambda b, j: (0, 0)),
            pl.BlockSpec((1, D), lambda b, j: (0, 0)),
        ],
        out_specs=pl.BlockSpec((None, tt_out, D), lambda b, j: (b, j, 0)),
        scratch_shapes=[pltpu.VMEM((n_p, 2 * C2), jnp.bfloat16)],
        compiler_params=pltpu.CompilerParams(
            dimension_semantics=("parallel", "parallel"),
            vmem_limit_bytes=32 * 1024 * 1024),
    )(xe_win, xo_win, w1b, params["scale1"], shift1,
      w2m, params["scale2"], shift2, wpb, params["bp"])

    y = out[:, :t_out2, :] if t_out2_pad != t_out2 else out
    return y, mask_pad[:, :, ::2]


# ----------------------------------------------------------------------------
# Pure-JAX f32 reference (for correctness check; kernel uses bf16 MXU operands)
# ----------------------------------------------------------------------------
def ref_forward(params, x, mask_pad, kernel_size=5):
    K = kernel_size
    xt = jnp.where(mask_pad.transpose(0, 2, 1), x, 0.0)
    xp = jnp.pad(xt, ((0, 0), (K - 1, 0), (0, 0)))
    h = lax.conv_general_dilated(xp, params["w1"], (1,), "VALID",
                                 dimension_numbers=("NWC", "WIO", "NWC")) + params["b1"]
    h = jnp.maximum(h * params["scale1"] + params["shift1"], 0.0)
    hp = jnp.pad(h, ((0, 0), (K - 1, 0), (0, 0)))
    h2 = lax.conv_general_dilated(hp, params["w2"], (2,), "VALID",
                                  dimension_numbers=("NWC", "WIO", "NWC")) + params["b2"]
    h2 = jnp.maximum(h2 * params["scale2"] + params["shift2"], 0.0)
    y = h2 @ params["wp"] + params["bp"][0]
    return y, mask_pad[:, :, ::2]


# ----------------------------------------------------------------------------
def make_params(key, enc_out_dim, llm_embed_dim, kernel_size, eps=1e-3):
    C, D, K = enc_out_dim, llm_embed_dim, kernel_size
    ks = jax.random.split(key, 16)

    def bn_fold(kg, kb, km, kv, ch):
        gamma = 1.0 + 0.1 * jax.random.normal(kg, (1, ch), jnp.float32)
        beta = 0.1 * jax.random.normal(kb, (1, ch), jnp.float32)
        mean = 0.1 * jax.random.normal(km, (1, ch), jnp.float32)
        var = 1.0 + 0.05 * jax.random.uniform(kv, (1, ch), jnp.float32)
        scale = gamma / jnp.sqrt(var + eps)
        shift = beta - mean * scale
        return scale, shift

    scale1, shift1 = bn_fold(ks[4], ks[5], ks[6], ks[7], 2 * C)
    scale2, shift2 = bn_fold(ks[8], ks[9], ks[10], ks[11], 4 * C)
    return {
        "w1": 0.1 * jax.random.normal(ks[0], (K, C, 2 * C), jnp.float32),
        "b1": 0.1 * jax.random.normal(ks[1], (1, 2 * C), jnp.float32),
        "w2": 0.1 * jax.random.normal(ks[2], (K, 2 * C, 4 * C), jnp.float32),
        "b2": 0.1 * jax.random.normal(ks[3], (1, 4 * C), jnp.float32),
        "scale1": scale1, "shift1": shift1,
        "scale2": scale2, "shift2": shift2,
        "wp": 0.05 * jax.random.normal(ks[12], (4 * C, D), jnp.float32),
        "bp": 0.1 * jax.random.normal(ks[13], (1, D), jnp.float32),
    }


if __name__ == "__main__":
    # small shapes consistent with the module (cnn_num == 2 branch: 4*enc_out_dim < llm_embed_dim)
    B, T = 2, 16
    ENC_OUT_DIM, LLM_EMBED_DIM, KSIZE = 32, 256, 5

    key = jax.random.PRNGKey(0)
    k_par, k_x = jax.random.split(key)
    params = make_params(k_par, ENC_OUT_DIM, LLM_EMBED_DIM, KSIZE)

    x = jax.random.normal(k_x, (B, T, ENC_OUT_DIM), jnp.float32)
    lengths = jnp.array([T, T - 4], jnp.int32)
    mask_pad = (jnp.arange(T)[None, None, :] < lengths[:, None, None])   # (B, 1, T) bool

    y, mask_out = cnn_subsampling_forward(params, x, mask_pad, kernel_size=KSIZE)
    y = jax.block_until_ready(y)

    y_ref, mask_ref = ref_forward(params, x, mask_pad, kernel_size=KSIZE)
    assert y.shape == (B, (T + 1) // 2, LLM_EMBED_DIM), y.shape
    # bf16 MXU operands vs. pure-f32 reference -> relaxed tolerance
    assert bool(jnp.allclose(y, y_ref, rtol=2e-2, atol=5e-2)), \
        float(jnp.max(jnp.abs(y - y_ref)))
    assert bool(jnp.array_equal(mask_out, mask_ref))

    print("KERNEL_OK")
</pallas_src>

<mosaic_0001>
module attributes {stable_mosaic.version = 11 : i64} {
  func.func @_fused_subsample_kernel(%arg0: i32, %arg1: i32, %arg2: memref<1x1x24x32xbf16, #tpu.memory_space<vmem>>, %arg3: memref<1x1x24x32xbf16, #tpu.memory_space<vmem>>, %arg4: memref<5x32x64xbf16, #tpu.memory_space<vmem>>, %arg5: memref<1x64xf32, #tpu.memory_space<vmem>>, %arg6: memref<1x64xf32, #tpu.memory_space<vmem>>, %arg7: memref<3x128x128xbf16, #tpu.memory_space<vmem>>, %arg8: memref<1x128xf32, #tpu.memory_space<vmem>>, %arg9: memref<1x128xf32, #tpu.memory_space<vmem>>, %arg10: memref<128x256xbf16, #tpu.memory_space<vmem>>, %arg11: memref<1x256xf32, #tpu.memory_space<vmem>>, %arg12: memref<1x8x256xf32, #tpu.memory_space<vmem>>, %arg13: memref<16x128xbf16, #tpu.memory_space<vmem>>) attributes {dimension_semantics = [#tpu.dimension_semantics<parallel>, #tpu.dimension_semantics<parallel>], iteration_bounds = array<i64: 2, 1>, scalar_prefetch = 0 : i64, scratch_operands = 1 : i64, tpu.core_type = #tpu.core_type<tc>, window_params = [{transform_indices = @transform_0, window_bounds = array<i64: 1, 1, 24, 32>}, {transform_indices = @transform_1, window_bounds = array<i64: 1, 1, 24, 32>}, {pipeline_mode = #tpu.pipeline_mode<synchronous>, transform_indices = @transform_2, window_bounds = array<i64: 5, 32, 64>}, {pipeline_mode = #tpu.pipeline_mode<synchronous>, transform_indices = @transform_3, window_bounds = array<i64: 1, 64>}, {pipeline_mode = #tpu.pipeline_mode<synchronous>, transform_indices = @transform_4, window_bounds = array<i64: 1, 64>}, {pipeline_mode = #tpu.pipeline_mode<synchronous>, transform_indices = @transform_5, window_bounds = array<i64: 3, 128, 128>}, {pipeline_mode = #tpu.pipeline_mode<synchronous>, transform_indices = @transform_6, window_bounds = array<i64: 1, 128>}, {pipeline_mode = #tpu.pipeline_mode<synchronous>, transform_indices = @transform_7, window_bounds = array<i64: 1, 128>}, {pipeline_mode = #tpu.pipeline_mode<synchronous>, transform_indices = @transform_8, window_bounds = array<i64: 128, 256>}, {pipeline_mode = #tpu.pipeline_mode<synchronous>, transform_indices = @transform_9, window_bounds = array<i64: 1, 256>}, {transform_indices = @transform_10, window_bounds = array<i64: 1, 8, 256>}]} {
    %cst = arith.constant 0.000000e+00 : f32
    %0 = vector.broadcast %cst : f32 to vector<16x64xf32>
    %cst_0 = arith.constant 0.000000e+00 : f32
    %1 = vector.broadcast %cst_0 : f32 to vector<16x64xf32>
    %c0 = arith.constant 0 : index
    %c0_1 = arith.constant 0 : index
    %c0_2 = arith.constant 0 : index
    %2 = vector.load %arg4[%c0, %c0_1, %c0_2] : memref<5x32x64xbf16, #tpu.memory_space<vmem>>, vector<1x32x64xbf16>
    %3 = vector.shape_cast %2 : vector<1x32x64xbf16> to vector<32x64xbf16>
    %c0_3 = arith.constant 0 : index
    %c0_4 = arith.constant 0 : index
    %c0_5 = arith.constant 0 : index
    %c0_6 = arith.constant 0 : index
    %4 = vector.load %arg2[%c0_3, %c0_4, %c0_5, %c0_6] : memref<1x1x24x32xbf16, #tpu.memory_space<vmem>>, vector<1x1x16x32xbf16>
    %5 = vector.shape_cast %4 : vector<1x1x16x32xbf16> to vector<16x32xbf16>
    %cst_7 = arith.constant dense<0.000000e+00> : vector<16x64xf32>
    %6 = tpu.matmul %5, %3, %cst_7 {dimension_numbers = #tpu.dot_dimension_numbers<[1], [0], [0], [1], [0, 0, 1, 1], [], []>} : vector<16x32xbf16>, vector<32x64xbf16>, vector<16x64xf32> -> vector<16x64xf32>
    %7 = arith.addf %0, %6 : vector<16x64xf32>
    %c0_8 = arith.constant 0 : index
    %c0_9 = arith.constant 0 : index
    %c0_10 = arith.constant 0 : index
    %c0_11 = arith.constant 0 : index
    %8 = vector.load %arg3[%c0_8, %c0_9, %c0_10, %c0_11] : memref<1x1x24x32xbf16, #tpu.memory_space<vmem>>, vector<1x1x16x32xbf16>
    %9 = vector.shape_cast %8 : vector<1x1x16x32xbf16> to vector<16x32xbf16>
    %cst_12 = arith.constant dense<0.000000e+00> : vector<16x64xf32>
    %10 = tpu.matmul %9, %3, %cst_12 {dimension_numbers = #tpu.dot_dimension_numbers<[1], [0], [0], [1], [0, 0, 1, 1], [], []>} : vector<16x32xbf16>, vector<32x64xbf16>, vector<16x64xf32> -> vector<16x64xf32>
    %11 = arith.addf %1, %10 : vector<16x64xf32>
    %c1 = arith.constant 1 : index
    %c0_13 = arith.constant 0 : index
    %c0_14 = arith.constant 0 : index
    %12 = vector.load %arg4[%c1, %c0_13, %c0_14] : memref<5x32x64xbf16, #tpu.memory_space<vmem>>, vector<1x32x64xbf16>
    %13 = vector.shape_cast %12 : vector<1x32x64xbf16> to vector<32x64xbf16>
    %c0_15 = arith.constant 0 : index
    %c0_16 = arith.constant 0 : index
    %c0_17 = arith.constant 0 : index
    %c0_18 = arith.constant 0 : index
    %14 = vector.load %arg3[%c0_15, %c0_16, %c0_17, %c0_18] : memref<1x1x24x32xbf16, #tpu.memory_space<vmem>>, vector<1x1x16x32xbf16>
    %15 = vector.shape_cast %14 : vector<1x1x16x32xbf16> to vector<16x32xbf16>
    %cst_19 = arith.constant dense<0.000000e+00> : vector<16x64xf32>
    %16 = tpu.matmul %15, %13, %cst_19 {dimension_numbers = #tpu.dot_dimension_numbers<[1], [0], [0], [1], [0, 0, 1, 1], [], []>} : vector<16x32xbf16>, vector<32x64xbf16>, vector<16x64xf32> -> vector<16x64xf32>
    %17 = arith.addf %7, %16 : vector<16x64xf32>
    %c0_20 = arith.constant 0 : index
    %c0_21 = arith.constant 0 : index
    %c1_22 = arith.constant 1 : index
    %c0_23 = arith.constant 0 : index
    %18 = vector.load %arg2[%c0_20, %c0_21, %c1_22, %c0_23] : memref<1x1x24x32xbf16, #tpu.memory_space<vmem>>, vector<1x1x16x32xbf16>
    %19 = vector.shape_cast %18 : vector<1x1x16x32xbf16> to vector<16x32xbf16>
    %cst_24 = arith.constant dense<0.000000e+00> : vector<16x64xf32>
    %20 = tpu.matmul %19, %13, %cst_24 {dimension_numbers = #tpu.dot_dimension_numbers<[1], [0], [0], [1], [0, 0, 1, 1], [], []>} : vector<16x32xbf16>, vector<32x64xbf16>, vector<16x64xf32> -> vector<16x64xf32>
    %21 = arith.addf %11, %20 : vector<16x64xf32>
    %c2 = arith.constant 2 : index
    %c0_25 = arith.constant 0 : index
    %c0_26 = arith.constant 0 : index
    %22 = vector.load %arg4[%c2, %c0_25, %c0_26] : memref<5x32x64xbf16, #tpu.memory_space<vmem>>, vector<1x32x64xbf16>
    %23 = vector.shape_cast %22 : vector<1x32x64xbf16> to vector<32x64xbf16>
    %c0_27 = arith.constant 0 : index
    %c0_28 = arith.constant 0 : index
    %c1_29 = arith.constant 1 : index
    %c0_30 = arith.constant 0 : index
    %24 = vector.load %arg2[%c0_27, %c0_28, %c1_29, %c0_30] : memref<1x1x24x32xbf16, #tpu.memory_space<vmem>>, vector<1x1x16x32xbf16>
    %25 = vector.shape_cast %24 : vector<1x1x16x32xbf16> to vector<16x32xbf16>
    %cst_31 = arith.constant dense<0.000000e+00> : vector<16x64xf32>
    %26 = tpu.matmul %25, %23, %cst_31 {dimension_numbers = #tpu.dot_dimension_numbers<[1], [0], [0], [1], [0, 0, 1, 1], [], []>} : vector<16x32xbf16>, vector<32x64xbf16>, vector<16x64xf32> -> vector<16x64xf32>
    %27 = arith.addf %17, %26 : vector<16x64xf32>
    %c0_32 = arith.constant 0 : index
    %c0_33 = arith.constant 0 : index
    %c1_34 = arith.constant 1 : index
    %c0_35 = arith.constant 0 : index
    %28 = vector.load %arg3[%c0_32, %c0_33, %c1_34, %c0_35] : memref<1x1x24x32xbf16, #tpu.memory_space<vmem>>, vector<1x1x16x32xbf16>
    %29 = vector.shape_cast %28 : vector<1x1x16x32xbf16> to vector<16x32xbf16>
    %cst_36 = arith.constant dense<0.000000e+00> : vector<16x64xf32>
    %30 = tpu.matmul %29, %23, %cst_36 {dimension_numbers = #tpu.dot_dimension_numbers<[1], [0], [0], [1], [0, 0, 1, 1], [], []>} : vector<16x32xbf16>, vector<32x64xbf16>, vector<16x64xf32> -> vector<16x64xf32>
    %31 = arith.addf %21, %30 : vector<16x64xf32>
    %c3 = arith.constant 3 : index
    %c0_37 = arith.constant 0 : index
    %c0_38 = arith.constant 0 : index
    %32 = vector.load %arg4[%c3, %c0_37, %c0_38] : memref<5x32x64xbf16, #tpu.memory_space<vmem>>, vector<1x32x64xbf16>
    %33 = vector.shape_cast %32 : vector<1x32x64xbf16> to vector<32x64xbf16>
    %c0_39 = arith.constant 0 : index
    %c0_40 = arith.constant 0 : index
    %c1_41 = arith.constant 1 : index
    %c0_42 = arith.constant 0 : index
    %34 = vector.load %arg3[%c0_39, %c0_40, %c1_41, %c0_42] : memref<1x1x24x32xbf16, #tpu.memory_space<vmem>>, vector<1x1x16x32xbf16>
    %35 = vector.shape_cast %34 : vector<1x1x16x32xbf16> to vector<16x32xbf16>
    %cst_43 = arith.constant dense<0.000000e+00> : vector<16x64xf32>
    %36 = tpu.matmul %35, %33, %cst_43 {dimension_numbers = #tpu.dot_dimension_numbers<[1], [0], [0], [1], [0, 0, 1, 1], [], []>} : vector<16x32xbf16>, vector<32x64xbf16>, vector<16x64xf32> -> vector<16x64xf32>
    %37 = arith.addf %27, %36 : vector<16x64xf32>
    %c0_44 = arith.constant 0 : index
    %c0_45 = arith.constant 0 : index
    %c2_46 = arith.constant 2 : index
    %c0_47 = arith.constant 0 : index
    %38 = vector.load %arg2[%c0_44, %c0_45, %c2_46, %c0_47] : memref<1x1x24x32xbf16, #tpu.memory_space<vmem>>, vector<1x1x16x32xbf16>
    %39 = vector.shape_cast %38 : vector<1x1x16x32xbf16> to vector<16x32xbf16>
    %cst_48 = arith.constant dense<0.000000e+00> : vector<16x64xf32>
    %40 = tpu.matmul %39, %33, %cst_48 {dimension_numbers = #tpu.dot_dimension_numbers<[1], [0], [0], [1], [0, 0, 1, 1], [], []>} : vector<16x32xbf16>, vector<32x64xbf16>, vector<16x64xf32> -> vector<16x64xf32>
    %41 = arith.addf %31, %40 : vector<16x64xf32>
    %c4 = arith.constant 4 : index
    %c0_49 = arith.constant 0 : index
    %c0_50 = arith.constant 0 : index
    %42 = vector.load %arg4[%c4, %c0_49, %c0_50] : memref<5x32x64xbf16, #tpu.memory_space<vmem>>, vector<1x32x64xbf16>
    %43 = vector.shape_cast %42 : vector<1x32x64xbf16> to vector<32x64xbf16>
    %c0_51 = arith.constant 0 : index
    %c0_52 = arith.constant 0 : index
    %c2_53 = arith.constant 2 : index
    %c0_54 = arith.constant 0 : index
    %44 = vector.load %arg2[%c0_51, %c0_52, %c2_53, %c0_54] : memref<1x1x24x32xbf16, #tpu.memory_space<vmem>>, vector<1x1x16x32xbf16>
    %45 = vector.shape_cast %44 : vector<1x1x16x32xbf16> to vector<16x32xbf16>
    %cst_55 = arith.constant dense<0.000000e+00> : vector<16x64xf32>
    %46 = tpu.matmul %45, %43, %cst_55 {dimension_numbers = #tpu.dot_dimension_numbers<[1], [0], [0], [1], [0, 0, 1, 1], [], []>} : vector<16x32xbf16>, vector<32x64xbf16>, vector<16x64xf32> -> vector<16x64xf32>
    %47 = arith.addf %37, %46 : vector<16x64xf32>
    %c0_56 = arith.constant 0 : index
    %c0_57 = arith.constant 0 : index
    %c2_58 = arith.constant 2 : index
    %c0_59 = arith.constant 0 : index
    %48 = vector.load %arg3[%c0_56, %c0_57, %c2_58, %c0_59] : memref<1x1x24x32xbf16, #tpu.memory_space<vmem>>, vector<1x1x16x32xbf16>
    %49 = vector.shape_cast %48 : vector<1x1x16x32xbf16> to vector<16x32xbf16>
    %cst_60 = arith.constant dense<0.000000e+00> : vector<16x64xf32>
    %50 = tpu.matmul %49, %43, %cst_60 {dimension_numbers = #tpu.dot_dimension_numbers<[1], [0], [0], [1], [0, 0, 1, 1], [], []>} : vector<16x32xbf16>, vector<32x64xbf16>, vector<16x64xf32> -> vector<16x64xf32>
    %51 = arith.addf %41, %50 : vector<16x64xf32>
    %c0_61 = arith.constant 0 : index
    %c0_62 = arith.constant 0 : index
    %52 = vector.load %arg5[%c0_61, %c0_62] : memref<1x64xf32, #tpu.memory_space<vmem>>, vector<1x64xf32>
    %53 = vector.broadcast %52 : vector<1x64xf32> to vector<16x64xf32>
    %54 = arith.mulf %47, %53 : vector<16x64xf32>
    %c0_63 = arith.constant 0 : index
    %c0_64 = arith.constant 0 : index
    %55 = vector.load %arg6[%c0_63, %c0_64] : memref<1x64xf32, #tpu.memory_space<vmem>>, vector<1x64xf32>
    %56 = vector.broadcast %55 : vector<1x64xf32> to vector<16x64xf32>
    %57 = arith.addf %54, %56 : vector<16x64xf32>
    %cst_65 = arith.constant 0.000000e+00 : f32
    %58 = vector.broadcast %cst_65 : f32 to vector<16x64xf32>
    %59 = arith.maximumf %57, %58 : vector<16x64xf32>
    %c0_66 = arith.constant 0 : index
    %c0_67 = arith.constant 0 : index
    %60 = vector.load %arg5[%c0_66, %c0_67] : memref<1x64xf32, #tpu.memory_space<vmem>>, vector<1x64xf32>
    %61 = vector.broadcast %60 : vector<1x64xf32> to vector<16x64xf32>
    %62 = arith.mulf %51, %61 : vector<16x64xf32>
    %c0_68 = arith.constant 0 : index
    %c0_69 = arith.constant 0 : index
    %63 = vector.load %arg6[%c0_68, %c0_69] : memref<1x64xf32, #tpu.memory_space<vmem>>, vector<1x64xf32>
    %64 = vector.broadcast %63 : vector<1x64xf32> to vector<16x64xf32>
    %65 = arith.addf %62, %64 : vector<16x64xf32>
    %cst_70 = arith.constant 0.000000e+00 : f32
    %66 = vector.broadcast %cst_70 : f32 to vector<16x64xf32>
    %67 = arith.maximumf %65, %66 : vector<16x64xf32>
    %68 = tpu.concatenate %59, %67 in 1 : vector<16x64xf32>, vector<16x64xf32> -> vector<16x128xf32>
    %69 = arith.truncf %68 : vector<16x128xf32> to vector<16x128xbf16>
    %c0_71 = arith.constant 0 : index
    %c0_72 = arith.constant 0 : index
    %70 = vector.load %arg13[%c0_71, %c0_72] : memref<16x128xbf16, #tpu.memory_space<vmem>>, vector<16x128xbf16>
    tpu.vector_store %arg13[%c0_71, %c0_72], %69 {strides = array<i32>} : memref<16x128xbf16, #tpu.memory_space<vmem>>, vector<16x128xbf16>,
    %c0_i32 = arith.constant 0 : i32
    %71 = arith.cmpi eq, %arg1, %c0_i32 : i32
    %72 = arith.extui %71 : i1 to i32
    %c0_i32_73 = arith.constant 0 : i32
    %73 = arith.cmpi ne, %72, %c0_i32_73 : i32
    scf.if %73 {
      %cst_106 = arith.constant 0.000000e+00 : bf16
      %107 = vector.broadcast %cst_106 : bf16 to vector<2x128xbf16>
      %c0_107 = arith.constant 0 : index
      %c0_108 = arith.constant 0 : index
      %108 = vector.load %arg13[%c0_107, %c0_108] : memref<16x128xbf16, #tpu.memory_space<vmem>>, vector<2x128xbf16>
      tpu.vector_store %arg13[%c0_107, %c0_108], %107 {strides = array<i32>} : memref<16x128xbf16, #tpu.memory_space<vmem>>, vector<2x128xbf16>,
    } else {
    }
    %cst_74 = arith.constant 0.000000e+00 : f32
    %74 = vector.broadcast %cst_74 : f32 to vector<8x128xf32>
    %c0_75 = arith.constant 0 : index
    %c0_76 = arith.constant 0 : index
    %75 = vector.load %arg13[%c0_75, %c0_76] : memref<16x128xbf16, #tpu.memory_space<vmem>>, vector<8x128xbf16>
    %c0_77 = arith.constant 0 : index
    %c0_78 = arith.constant 0 : index
    %c0_79 = arith.constant 0 : index
    %76 = vector.load %arg7[%c0_77, %c0_78, %c0_79] : memref<3x128x128xbf16, #tpu.memory_space<vmem>>, vector<1x128x128xbf16>
    %77 = vector.shape_cast %76 : vector<1x128x128xbf16> to vector<128x128xbf16>
    %cst_80 = arith.constant dense<0.000000e+00> : vector<8x128xf32>
    %78 = tpu.matmul %75, %77, %cst_80 {dimension_numbers = #tpu.dot_dimension_numbers<[1], [0], [0], [1], [0, 0, 1, 1], [], []>} : vector<8x128xbf16>, vector<128x128xbf16>, vector<8x128xf32> -> vector<8x128xf32>
    %79 = arith.addf %74, %78 : vector<8x128xf32>
    %c1_81 = arith.constant 1 : index
    %c0_82 = arith.constant 0 : index
    %80 = vector.load %arg13[%c1_81, %c0_82] : memref<16x128xbf16, #tpu.memory_space<vmem>>, vector<8x128xbf16>
    %c1_83 = arith.constant 1 : index
    %c0_84 = arith.constant 0 : index
    %c0_85 = arith.constant 0 : index
    %81 = vector.load %arg7[%c1_83, %c0_84, %c0_85] : memref<3x128x128xbf16, #tpu.memory_space<vmem>>, vector<1x128x128xbf16>
    %82 = vector.shape_cast %81 : vector<1x128x128xbf16> to vector<128x128xbf16>
    %cst_86 = arith.constant dense<0.000000e+00> : vector<8x128xf32>
    %83 = tpu.matmul %80, %82, %cst_86 {dimension_numbers = #tpu.dot_dimension_numbers<[1], [0], [0], [1], [0, 0, 1, 1], [], []>} : vector<8x128xbf16>, vector<128x128xbf16>, vector<8x128xf32> -> vector<8x128xf32>
    %84 = arith.addf %79, %83 : vector<8x128xf32>
    %c2_87 = arith.constant 2 : index
    %c0_88 = arith.constant 0 : index
    %85 = vector.load %arg13[%c2_87, %c0_88] : memref<16x128xbf16, #tpu.memory_space<vmem>>, vector<8x128xbf16>
    %c2_89 = arith.constant 2 : index
    %c0_90 = arith.constant 0 : index
    %c0_91 = arith.constant 0 : index
    %86 = vector.load %arg7[%c2_89, %c0_90, %c0_91] : memref<3x128x128xbf16, #tpu.memory_space<vmem>>, vector<1x128x128xbf16>
    %87 = vector.shape_cast %86 : vector<1x128x128xbf16> to vector<128x128xbf16>
    %cst_92 = arith.constant dense<0.000000e+00> : vector<8x128xf32>
    %88 = tpu.matmul %85, %87, %cst_92 {dimension_numbers = #tpu.dot_dimension_numbers<[1], [0], [0], [1], [0, 0, 1, 1], [], []>} : vector<8x128xbf16>, vector<128x128xbf16>, vector<8x128xf32> -> vector<8x128xf32>
    %89 = arith.addf %84, %88 : vector<8x128xf32>
    %c0_93 = arith.constant 0 : index
    %c0_94 = arith.constant 0 : index
    %90 = vector.load %arg8[%c0_93, %c0_94] : memref<1x128xf32, #tpu.memory_space<vmem>>, vector<1x128xf32>
    %91 = vector.broadcast %90 : vector<1x128xf32> to vector<8x128xf32>
    %92 = arith.mulf %89, %91 : vector<8x128xf32>
    %c0_95 = arith.constant 0 : index
    %c0_96 = arith.constant 0 : index
    %93 = vector.load %arg9[%c0_95, %c0_96] : memref<1x128xf32, #tpu.memory_space<vmem>>, vector<1x128xf32>
    %94 = vector.broadcast %93 : vector<1x128xf32> to vector<8x128xf32>
    %95 = arith.addf %92, %94 : vector<8x128xf32>
    %cst_97 = arith.constant 0.000000e+00 : f32
    %96 = vector.broadcast %cst_97 : f32 to vector<8x128xf32>
    %97 = arith.maximumf %95, %96 : vector<8x128xf32>
    %98 = arith.truncf %97 : vector<8x128xf32> to vector<8x128xbf16>
    %c0_98 = arith.constant 0 : index
    %c0_99 = arith.constant 0 : index
    %99 = vector.load %arg10[%c0_98, %c0_99] : memref<128x256xbf16, #tpu.memory_space<vmem>>, vector<128x256xbf16>
    %cst_100 = arith.constant dense<0.000000e+00> : vector<8x256xf32>
    %100 = tpu.matmul %98, %99, %cst_100 {dimension_numbers = #tpu.dot_dimension_numbers<[1], [0], [0], [1], [0, 0, 1, 1], [], []>} : vector<8x128xbf16>, vector<128x256xbf16>, vector<8x256xf32> -> vector<8x256xf32>
    %c0_101 = arith.constant 0 : index
    %c0_102 = arith.constant 0 : index
    %101 = vector.load %arg11[%c0_101, %c0_102] : memref<1x256xf32, #tpu.memory_space<vmem>>, vector<1x256xf32>
    %102 = vector.broadcast %101 : vector<1x256xf32> to vector<8x256xf32>
    %103 = arith.addf %100, %102 : vector<8x256xf32>
    %c0_103 = arith.constant 0 : index
    %c0_104 = arith.constant 0 : index
    %c0_105 = arith.constant 0 : index
    %104 = vector.load %arg12[%c0_103, %c0_104, %c0_105] : memref<1x8x256xf32, #tpu.memory_space<vmem>>, vector<1x8x256xf32>
    %105 = vector.shape_cast %104 : vector<1x8x256xf32> to vector<8x256xf32>
    %106 = vector.shape_cast %103 : vector<8x256xf32> to vector<1x8x256xf32>
    tpu.vector_store %arg12[%c0_103, %c0_104, %c0_105], %106 {strides = array<i32>} : memref<1x8x256xf32, #tpu.memory_space<vmem>>, vector<1x8x256xf32>,
    return
  }
  func.func @transform_0(%arg0: i32, %arg1: i32) -> (i32, i32, i32, i32) {
    %c0_i32 = arith.constant 0 : i32
    %c0_i32_0 = arith.constant 0 : i32
    %c0_i32_1 = arith.constant 0 : i32
    return %arg0, %arg1, %c0_i32, %c0_i32_0 : i32, i32, i32, i32
  }
  func.func @transform_1(%arg0: i32, %arg1: i32) -> (i32, i32, i32, i32) {
    %c0_i32 = arith.constant 0 : i32
    %c0_i32_0 = arith.constant 0 : i32
    %c0_i32_1 = arith.constant 0 : i32
    return %arg0, %arg1, %c0_i32, %c0_i32_0 : i32, i32, i32, i32
  }
  func.func @transform_2(%arg0: i32, %arg1: i32) -> (i32, i32, i32) {
    %c0_i32 = arith.constant 0 : i32
    %c0_i32_0 = arith.constant 0 : i32
    %c0_i32_1 = arith.constant 0 : i32
    %c0_i32_2 = arith.constant 0 : i32
    return %c0_i32, %c0_i32_0, %c0_i32_1 : i32, i32, i32
  }
  func.func @transform_3(%arg0: i32, %arg1: i32) -> (i32, i32) {
    %c0_i32 = arith.constant 0 : i32
    %c0_i32_0 = arith.constant 0 : i32
    %c0_i32_1 = arith.constant 0 : i32
    return %c0_i32, %c0_i32_0 : i32, i32
  }
  func.func @transform_4(%arg0: i32, %arg1: i32) -> (i32, i32) {
    %c0_i32 = arith.constant 0 : i32
    %c0_i32_0 = arith.constant 0 : i32
    %c0_i32_1 = arith.constant 0 : i32
    return %c0_i32, %c0_i32_0 : i32, i32
  }
  func.func @transform_5(%arg0: i32, %arg1: i32) -> (i32, i32, i32) {
    %c0_i32 = arith.constant 0 : i32
    %c0_i32_0 = arith.constant 0 : i32
    %c0_i32_1 = arith.constant 0 : i32
    %c0_i32_2 = arith.constant 0 : i32
    return %c0_i32, %c0_i32_0, %c0_i32_1 : i32, i32, i32
  }
  func.func @transform_6(%arg0: i32, %arg1: i32) -> (i32, i32) {
    %c0_i32 = arith.constant 0 : i32
    %c0_i32_0 = arith.constant 0 : i32
    %c0_i32_1 = arith.constant 0 : i32
    return %c0_i32, %c0_i32_0 : i32, i32
  }
  func.func @transform_7(%arg0: i32, %arg1: i32) -> (i32, i32) {
    %c0_i32 = arith.constant 0 : i32
    %c0_i32_0 = arith.constant 0 : i32
    %c0_i32_1 = arith.constant 0 : i32
    return %c0_i32, %c0_i32_0 : i32, i32
  }
  func.func @transform_8(%arg0: i32, %arg1: i32) -> (i32, i32) {
    %c0_i32 = arith.constant 0 : i32
    %c0_i32_0 = arith.constant 0 : i32
    %c0_i32_1 = arith.constant 0 : i32
    return %c0_i32, %c0_i32_0 : i32, i32
  }
  func.func @transform_9(%arg0: i32, %arg1: i32) -> (i32, i32) {
    %c0_i32 = arith.constant 0 : i32
    %c0_i32_0 = arith.constant 0 : i32
    %c0_i32_1 = arith.constant 0 : i32
    return %c0_i32, %c0_i32_0 : i32, i32
  }
  func.func @transform_10(%arg0: i32, %arg1: i32) -> (i32, i32, i32) {
    %c0_i32 = arith.constant 0 : i32
    %c0_i32_0 = arith.constant 0 : i32
    return %arg0, %arg1, %c0_i32 : i32, i32, i32
  }
}

</mosaic_0001>

<llo_original>
// kernel: tpu_custom_call.1
$region0: #{tpu_custom_call.1}
  #allocation0 [shape = 'u32[]', space=smem, size = 0x4, offset = 0x4, fixed_abs, tag = 'smem constant byte address 0x4 - core index']
  #allocation1 [shape = 'u32[72,128]{1,0:T(1,128)}', space=vmem, size = 0x9000, scoped, tag = 'internal scratch']
  #allocation2 [shape = 'bf16[16,128]{1,0:T(8,128)(2,1)}', space=vmem, size = 0x1000, scoped, tag = 'scratch operand']
  %s0 = inlined_call_operand.hbm [shape: bf16[2,1,24,32], index: 0, kind: input, shape index: {}]
  %s1 = inlined_call_operand.hbm [shape: bf16[2,1,24,32], index: 1, kind: input, shape index: {}]
  %s2 = inlined_call_operand.hbm [shape: bf16[5,32,64], index: 2, kind: input, shape index: {}]
  %s3 = inlined_call_operand.vmem [shape: f32[1,64], index: 3, kind: input, shape index: {}]
  %s4 = inlined_call_operand.hbm [shape: f32[1,64], index: 4, kind: input, shape index: {}]
  %s5 = inlined_call_operand.hbm [shape: bf16[3,128,128], index: 5, kind: input, shape index: {}]
  %s6 = inlined_call_operand.vmem [shape: f32[1,128], index: 6, kind: input, shape index: {}]
  %s7 = inlined_call_operand.vmem [shape: f32[1,128], index: 7, kind: input, shape index: {}]
  %s8 = inlined_call_operand.hbm [shape: bf16[128,256], index: 8, kind: input, shape index: {}]
  %s9 = inlined_call_operand.vmem [shape: f32[1,256], index: 9, kind: input, shape index: {}]
  %s10 = inlined_call_operand.hbm [shape: f32[2,8,256], index: 10, kind: output, shape index: {}]
  %s11 = sld [smem:[#allocation0]]
  $region101: #{tpu_custom_call.1} parent=0
    _
  %s13 = ssub.s32 1, %s11
  %s14 = scalar_select 0, %s13, %s11
  $region1: #{tpu_custom_call.1} parent=0
    #allocation3 [shape = 'u8[12288]{0}', space=vmem, size = 0x3000, scoped, tag = 'input window, operand 0']
    #allocation4 [shape = 's32[2]{0}', space=sflag, size = 0x8, scoped, tag = 'scoped memory for tpu_custom_call.1']
    #allocation5 [shape = 's32[2]{0}', space=sflag, size = 0x8, scoped, tag = 'scoped memory for tpu_custom_call.1']
    #allocation6 [shape = 'u8[12288]{0}', space=vmem, size = 0x3000, scoped, tag = 'input window, operand 1']
    #allocation7 [shape = 's32[2]{0}', space=sflag, size = 0x8, scoped, tag = 'scoped memory for tpu_custom_call.1']
    #allocation8 [shape = 'u8[40960]{0}', space=vmem, size = 0xa000, scoped, tag = 'input window, operand 2, single buffered']
    #allocation9 [shape = 'u8[512]{0}', space=vmem, size = 0x400, scoped, tag = 'input window, operand 4, single buffered']
    #allocation10 [shape = 's32[1]{0}', space=sflag, size = 0x4, scoped, tag = 'scoped memory for tpu_custom_call.1']
    #allocation11 [shape = 'u8[98304]{0}', space=vmem, size = 0x18000, scoped, tag = 'input window, operand 5, single buffered']
    #allocation12 [shape = 'u8[65536]{0}', space=vmem, size = 0x10000, scoped, tag = 'input window, operand 8, single buffered']
    #allocation13 [shape = 's32[1]{0}', space=sflag, size = 0x4, scoped, tag = 'scoped memory for tpu_custom_call.1']
    #allocation14 [shape = 'u8[16384]{0}', space=vmem, size = 0x4000, scoped, tag = 'output window, operand 0']
    %15 = vsyncpa [#allocation4], 0
    %s16 = scalar_lea.sflag [#allocation4], 1
    %17 = vsyncpa %s16, 0
    %18 = vsyncpa [#allocation7], 0
    %s19 = scalar_lea.sflag [#allocation7], 1
    %20 = vsyncpa %s19, 0
    %21 = vsyncpa [#allocation10], 0
    %22 = vsyncpa [#allocation13], 0
    %23 = vsyncpa [#allocation5], 0
    %s24 = scalar_lea.sflag [#allocation5], 1
    %25 = vsyncpa %s24, 0
    loop: start=0, step=1, limit=4
    $region2: #{tpu_custom_call.1} parent=1 // loop_pre_header
      _
    $region3: #{tpu_custom_call.1} parent=1 // loop_header
      %s27 = sphi 0, %s31
      %p28 = scmp.ge.s32.totalorder %s27, 4
      %s34 = sphi 0, %s46
      %s35 = sphi 0, %s42
      %s36 = sphi 0, %s34
      %s37 = sphi 0, %s35
      %s38 = sphi 0, %s36
      %s39 = sphi 0, %s37
      %s51 = sphi 0, %s53
      %s54 = sphi 0, %s51
      %s55 = sphi 0, %s54
      %s71 = sphi 0, %s55
      %s79 = sphi 0, %s81
      %s82 = sphi 0, %s79
      %s83 = sphi 0, %s82
      %s99 = sphi 0, %s83
      %s103 = sphi 0, %s103
      %s105 = sphi 0, %s103
      %s106 = sphi 0, %s105
      %s120 = sphi 0, %s106
      %s124 = sphi 0, %s124
      %s126 = sphi 0, %s124
      %s127 = sphi 0, %s126
      %s141 = sphi 0, %s127
      %s145 = sphi 0, %s145
      %s147 = sphi 0, %s145
      %s148 = sphi 0, %s147
      %s162 = sphi 0, %s148
      %s166 = sphi 0, %s166
      %s168 = sphi 0, %s166
      %s169 = sphi 0, %s168
      %s183 = sphi 0, %s169
      %s187 = sphi 0, %s187
      %s189 = sphi 0, %s187
      %s190 = sphi 0, %s189
      %s204 = sphi 0, %s190
      %s208 = sphi 0, %s208
      %s210 = sphi 0, %s208
      %s211 = sphi 0, %s210
      %s225 = sphi 0, %s211
      %s229 = sphi 0, %s229
      %s231 = sphi 0, %s229
      %s232 = sphi 0, %s231
      %s246 = sphi 0, %s232
      %s250 = sphi 0, %s250
      %s252 = sphi 0, %s250
      %s253 = sphi 0, %s252
      %s267 = sphi 0, %s253
      %s275 = sphi 0, %s277
      %s278 = sphi 0, %s275
      %s279 = sphi 0, %s278
      %s295 = sphi 0, %s279
    $region4: #{tpu_custom_call.1} parent=1 // loop_header_branch
      %30 = sbr.rel (%p28) target = $region8
    $region5: #{tpu_custom_call.1} parent=1 // loop_body
      %s32 = ssub.s32 %s27, 1
      %s33 = ssub.s32 %s27, 2
      %s40 = sadd.s32 1, %s35
      %p41 = scmp.ge.s32.totalorder %s40, 1
      %s42 = scalar_select %p41, 0, %s40
      %s43 = sadd.s32 1, %s34
      %s44 = scalar_select %p41, %s43, %s34
      %p45 = scmp.ge.s32.totalorder %s44, 2
      %s46 = scalar_select %p45, 0, %s44
      %s47 = ssub.s32 %s34, %s46
      %s48 = ssub.s32 %s35, %s42
      %s49 = sor.u32 %s47, %s48
      %p50 = scmp.eq.s32.totalorder %s49, 0
      %s52 = sadd.s32 %s51, 1
      %s53 = scalar_select %p50, %s51, %s52
      %p56 = pneg %p50
      %p57 = scmp.eq.s32.totalorder %s27, 1
      %p58 = por %p56, %p57
      %p59 = scmp.ne.s32.totalorder %s51, %s54
      %p60 = scmp.eq.s32.totalorder %s27, 0
      %p61 = por %p59, %p60
      %p62 = scmp.ne.s32.totalorder %s51, %s54
      %p63 = scmp.eq.s32.totalorder %s32, 1
      %p64 = por %p62, %p63
      %p65 = scmp.ne.s32.totalorder %s54, %s55
      %p66 = scmp.eq.s32.totalorder %s32, 0
      %p67 = por %p65, %p66
      %p68 = scmp.ne.s32.totalorder %s54, %s55
      %p69 = scmp.eq.s32.totalorder %s33, 1
      %p70 = por %p68, %p69
      %p72 = scmp.ne.s32.totalorder %s55, %s71
      %p73 = scmp.eq.s32.totalorder %s33, 0
      %p74 = por %p72, %p73
      %s75 = ssub.s32 %s34, %s46
      %s76 = ssub.s32 %s35, %s42
      %s77 = sor.u32 %s75, %s76
      %p78 = scmp.eq.s32.totalorder %s77, 0
      %s80 = sadd.s32 %s79, 1
      %s81 = scalar_select %p78, %s79, %s80
      %p84 = pneg %p78
      %p85 = scmp.eq.s32.totalorder %s27, 1
      %p86 = por %p84, %p85
      %p87 = scmp.ne.s32.totalorder %s79, %s82
      %p88 = scmp.eq.s32.totalorder %s27, 0
      %p89 = por %p87, %p88
      %p90 = scmp.ne.s32.totalorder %s79, %s82
      %p91 = scmp.eq.s32.totalorder %s32, 1
      %p92 = por %p90, %p91
      %p93 = scmp.ne.s32.totalorder %s82, %s83
      %p94 = scmp.eq.s32.totalorder %s32, 0
      %p95 = por %p93, %p94
      %p96 = scmp.ne.s32.totalorder %s82, %s83
      %p97 = scmp.eq.s32.totalorder %s33, 1
      %p98 = por %p96, %p97
      %p100 = scmp.ne.s32.totalorder %s83, %s99
      %p101 = scmp.eq.s32.totalorder %s33, 0
      %p102 = por %p100, %p101
      %s104 = sadd.s32 %s103, 1
      %p107 = scmp.eq.s32.totalorder %s27, 1
      %p108 = scmp.ne.s32.totalorder %s103, %s105
      %p109 = scmp.eq.s32.totalorder %s27, 0
      %p110 = por %p108, %p109
      %p111 = scmp.ne.s32.totalorder %s103, %s105
      %p112 = scmp.eq.s32.totalorder %s32, 1
      %p113 = por %p111, %p112
      %p114 = scmp.ne.s32.totalorder %s105, %s106
      %p115 = scmp.eq.s32.totalorder %s32, 0
      %p116 = por %p114, %p115
      %p117 = scmp.ne.s32.totalorder %s105, %s106
      %p118 = scmp.eq.s32.totalorder %s33, 1
      %p119 = por %p117, %p118
      %p121 = scmp.ne.s32.totalorder %s106, %s120
      %p122 = scmp.eq.s32.totalorder %s33, 0
      %p123 = por %p121, %p122
      %s125 = sadd.s32 %s124, 1
      %p128 = scmp.eq.s32.totalorder %s27, 1
      %p129 = scmp.ne.s32.totalorder %s124, %s126
      %p130 = scmp.eq.s32.totalorder %s27, 0
      %p131 = por %p129, %p130
      %p132 = scmp.ne.s32.totalorder %s124, %s126
      %p133 = scmp.eq.s32.totalorder %s32, 1
      %p134 = por %p132, %p133
      %p135 = scmp.ne.s32.totalorder %s126, %s127
      %p136 = scmp.eq.s32.totalorder %s32, 0
      %p137 = por %p135, %p136
      %p138 = scmp.ne.s32.totalorder %s126, %s127
      %p139 = scmp.eq.s32.totalorder %s33, 1
      %p140 = por %p138, %p139
      %p142 = scmp.ne.s32.totalorder %s127, %s141
      %p143 = scmp.eq.s32.totalorder %s33, 0
      %p144 = por %p142, %p143
      %s146 = sadd.s32 %s145, 1
      %p149 = scmp.eq.s32.totalorder %s27, 1
      %p150 = scmp.ne.s32.totalorder %s145, %s147
      %p151 = scmp.eq.s32.totalorder %s27, 0
      %p152 = por %p150, %p151
      %p153 = scmp.ne.s32.totalorder %s145, %s147
      %p154 = scmp.eq.s32.totalorder %s32, 1
      %p155 = por %p153, %p154
      %p156 = scmp.ne.s32.totalorder %s147, %s148
      %p157 = scmp.eq.s32.totalorder %s32, 0
      %p158 = por %p156, %p157
      %p159 = scmp.ne.s32.totalorder %s147, %s148
      %p160 = scmp.eq.s32.totalorder %s33, 1
      %p161 = por %p159, %p160
      %p163 = scmp.ne.s32.totalorder %s148, %s162
      %p164 = scmp.eq.s32.totalorder %s33, 0
      %p165 = por %p163, %p164
      %s167 = sadd.s32 %s166, 1
      %p170 = scmp.eq.s32.totalorder %s27, 1
      %p171 = scmp.ne.s32.totalorder %s166, %s168
      %p172 = scmp.eq.s32.totalorder %s27, 0
      %p173 = por %p171, %p172
      %p174 = scmp.ne.s32.totalorder %s166, %s168
      %p175 = scmp.eq.s32.totalorder %s32, 1
      %p176 = por %p174, %p175
      %p177 = scmp.ne.s32.totalorder %s168, %s169
      %p178 = scmp.eq.s32.totalorder %s32, 0
      %p179 = por %p177, %p178
      %p180 = scmp.ne.s32.totalorder %s168, %s169
      %p181 = scmp.eq.s32.totalorder %s33, 1
      %p182 = por %p180, %p181
      %p184 = scmp.ne.s32.totalorder %s169, %s183
      %p185 = scmp.eq.s32.totalorder %s33, 0
      %p186 = por %p184, %p185
      %s188 = sadd.s32 %s187, 1
      %p191 = scmp.eq.s32.totalorder %s27, 1
      %p192 = scmp.ne.s32.totalorder %s187, %s189
      %p193 = scmp.eq.s32.totalorder %s27, 0
      %p194 = por %p192, %p193
      %p195 = scmp.ne.s32.totalorder %s187, %s189
      %p196 = scmp.eq.s32.totalorder %s32, 1
      %p197 = por %p195, %p196
      %p198 = scmp.ne.s32.totalorder %s189, %s190
      %p199 = scmp.eq.s32.totalorder %s32, 0
      %p200 = por %p198, %p199
      %p201 = scmp.ne.s32.totalorder %s189, %s190
      %p202 = scmp.eq.s32.totalorder %s33, 1
      %p203 = por %p201, %p202
      %p205 = scmp.ne.s32.totalorder %s190, %s204
      %p206 = scmp.eq.s32.totalorder %s33, 0
      %p207 = por %p205, %p206
      %s209 = sadd.s32 %s208, 1
      %p212 = scmp.eq.s32.totalorder %s27, 1
      %p213 = scmp.ne.s32.totalorder %s208, %s210
      %p214 = scmp.eq.s32.totalorder %s27, 0
      %p215 = por %p213, %p214
      %p216 = scmp.ne.s32.totalorder %s208, %s210
      %p217 = scmp.eq.s32.totalorder %s32, 1
      %p218 = por %p216, %p217
      %p219 = scmp.ne.s32.totalorder %s210, %s211
      %p220 = scmp.eq.s32.totalorder %s32, 0
      %p221 = por %p219, %p220
      %p222 = scmp.ne.s32.totalorder %s210, %s211
      %p223 = scmp.eq.s32.totalorder %s33, 1
      %p224 = por %p222, %p223
      %p226 = scmp.ne.s32.totalorder %s211, %s225
      %p227 = scmp.eq.s32.totalorder %s33, 0
      %p228 = por %p226, %p227
      %s230 = sadd.s32 %s229, 1
      %p233 = scmp.eq.s32.totalorder %s27, 1
      %p234 = scmp.ne.s32.totalorder %s229, %s231
      %p235 = scmp.eq.s32.totalorder %s27, 0
      %p236 = por %p234, %p235
      %p237 = scmp.ne.s32.totalorder %s229, %s231
      %p238 = scmp.eq.s32.totalorder %s32, 1
      %p239 = por %p237, %p238
      %p240 = scmp.ne.s32.totalorder %s231, %s232
      %p241 = scmp.eq.s32.totalorder %s32, 0
      %p242 = por %p240, %p241
      %p243 = scmp.ne.s32.totalorder %s231, %s232
      %p244 = scmp.eq.s32.totalorder %s33, 1
      %p245 = por %p243, %p244
      %p247 = scmp.ne.s32.totalorder %s232, %s246
      %p248 = scmp.eq.s32.totalorder %s33, 0
      %p249 = por %p247, %p248
      %s251 = sadd.s32 %s250, 1
      %p254 = scmp.eq.s32.totalorder %s27, 1
      %p255 = scmp.ne.s32.totalorder %s250, %s252
      %p256 = scmp.eq.s32.totalorder %s27, 0
      %p257 = por %p255, %p256
      %p258 = scmp.ne.s32.totalorder %s250, %s252
      %p259 = scmp.eq.s32.totalorder %s32, 1
      %p260 = por %p258, %p259
      %p261 = scmp.ne.s32.totalorder %s252, %s253
      %p262 = scmp.eq.s32.totalorder %s32, 0
      %p263 = por %p261, %p262
      %p264 = scmp.ne.s32.totalorder %s252, %s253
      %p265 = scmp.eq.s32.totalorder %s33, 1
      %p266 = por %p264, %p265
      %p268 = scmp.ne.s32.totalorder %s253, %s267
      %p269 = scmp.eq.s32.totalorder %s33, 0
      %p270 = por %p268, %p269
      %s271 = ssub.s32 %s34, %s46
      %s272 = ssub.s32 %s35, %s42
      %s273 = sor.u32 %s271, %s272
      %p274 = scmp.eq.s32.totalorder %s273, 0
      %s276 = sadd.s32 %s275, 1
      %s277 = scalar_select %p274, %s275, %s276
      %p280 = pneg %p274
      %p281 = scmp.eq.s32.totalorder %s27, 1
      %p282 = por %p280, %p281
      %p283 = scmp.ne.s32.totalorder %s275, %s278
      %p284 = scmp.eq.s32.totalorder %s27, 0
      %p285 = por %p283, %p284
      %p286 = scmp.ne.s32.totalorder %s275, %s278
      %p287 = scmp.eq.s32.totalorder %s32, 1
      %p288 = por %p286, %p287
      %p289 = scmp.ne.s32.totalorder %s278, %s279
      %p290 = scmp.eq.s32.totalorder %s32, 0
      %p291 = por %p289, %p290
      %p292 = scmp.ne.s32.totalorder %s278, %s279
      %p293 = scmp.eq.s32.totalorder %s33, 1
      %p294 = por %p292, %p293
      %p296 = scmp.ne.s32.totalorder %s279, %s295
      %p297 = scmp.eq.s32.totalorder %s33, 0
      %p298 = por %p296, %p297
      %p299 = scmp.le.s32.totalorder 1, %s27
      %p300 = scmp.lt.s32.totalorder %s27, 3
      %p301 = pnand %p299, %p300
      %p302 = pneg %p301
      // Predicated region
      $region9: #{tpu_custom_call.1} parent=5 // pred_check
        _
      $region10: #{tpu_custom_call.1} parent=5 // pred_check_branch
        %304 = sbr.rel (%p301) target = $region12
      $region11: #{tpu_custom_call.1} parent=5 // pred_region
        %s305 = ssub.s32 %s27, 1
        // Predicated region
        $region13: #{tpu_custom_call.1} parent=11 // pred_check
          %p306 = pneg %p116
        $region14: #{tpu_custom_call.1} parent=11 // pred_check_branch
          %308 = sbr.rel (%p306) target = $region16
        $region15: #{tpu_custom_call.1} parent=11 // pred_region
          %310 = vsyncadd [#allocation7], 0
          %s311 = sshll.u32 %s2, 4
          %s312 = int_to_ptr.hbm [resolvable:$true] %s311
          %s313 = sshll.u32 [#allocation8], 4
          %s314 = int_to_ptr.vmem [resolvable:$true] %s313
          %319 = dma.hbm_to_vmem [thread:$0]  %s312, 1280, %s314, [#allocation7], 64, 64, 4
        $region16: #{tpu_custom_call.1} parent=11 // pred_fallthru
          _
        // Predicated region
        $region17: #{tpu_custom_call.1} parent=11 // pred_check
          %p320 = pneg %p137
        $region18: #{tpu_custom_call.1} parent=11 // pred_check_branch
          %322 = sbr.rel (%p320) target = $region20
        $region19: #{tpu_custom_call.1} parent=11 // pred_region
          _
        $region20: #{tpu_custom_call.1} parent=11 // pred_fallthru
          _
        // Predicated region
        $region21: #{tpu_custom_call.1} parent=11 // pred_check
          %p323 = pneg %p158
        $region22: #{tpu_custom_call.1} parent=11 // pred_check_branch
          %325 = sbr.rel (%p323) target = $region24
        $region23: #{tpu_custom_call.1} parent=11 // pred_region
          %327 = vsyncadd [#allocation10], 0
          %s329 = sshll.u32 %s4, 4
          %s330 = int_to_ptr.hbm [resolvable:$true] %s329
          %s331 = sshll.u32 [#allocation9], 4
          %s332 = int_to_ptr.vmem [resolvable:$true] %s331
          %334 = dma.hbm_to_vmem [thread:$0]  %s330, 16, %s332, [#allocation10]
        $region24: #{tpu_custom_call.1} parent=11 // pred_fallthru
          _
        // Predicated region
        $region25: #{tpu_custom_call.1} parent=11 // pred_check
          %p335 = pneg %p179
        $region26: #{tpu_custom_call.1} parent=11 // pred_check_branch
          %337 = sbr.rel (%p335) target = $region28
        $region27: #{tpu_custom_call.1} parent=11 // pred_region
          %339 = vsyncadd [#allocation10], 0
          %s340 = sshll.u32 %s5, 4
          %s341 = int_to_ptr.hbm [resolvable:$true] %s340
          %s342 = sshll.u32 [#allocation11], 4
          %s343 = int_to_ptr.vmem [resolvable:$true] %s342
          %348 = dma.hbm_to_vmem [thread:$0]  %s341, 3072, %s343, [#allocation10], 64, 64, 4
        $region28: #{tpu_custom_call.1} parent=11 // pred_fallthru
          _
        // Predicated region
        $region29: #{tpu_custom_call.1} parent=11 // pred_check
          %p349 = pneg %p200
        $region30: #{tpu_custom_call.1} parent=11 // pred_check_branch
          %351 = sbr.rel (%p349) target = $region32
        $region31: #{tpu_custom_call.1} parent=11 // pred_region
          _
        $region32: #{tpu_custom_call.1} parent=11 // pred_fallthru
          _
        // Predicated region
        $region33: #{tpu_custom_call.1} parent=11 // pred_check
          %p352 = pneg %p221
        $region34: #{tpu_custom_call.1} parent=11 // pred_check_branch
          %354 = sbr.rel (%p352) target = $region36
        $region35: #{tpu_custom_call.1} parent=11 // pred_region
          _
        $region36: #{tpu_custom_call.1} parent=11 // pred_fallthru
          _
        // Predicated region
        $region37: #{tpu_custom_call.1} parent=11 // pred_check
          %p355 = pneg %p242
        $region38: #{tpu_custom_call.1} parent=11 // pred_check_branch
          %357 = sbr.rel (%p355) target = $region40
        $region39: #{tpu_custom_call.1} parent=11 // pred_region
          %359 = vsyncadd [#allocation13], 0
          %s360 = sshll.u32 %s8, 4
          %s361 = int_to_ptr.hbm [resolvable:$true] %s360
          %s362 = sshll.u32 [#allocation12], 4
          %s363 = int_to_ptr.vmem [resolvable:$true] %s362
          %368 = dma.hbm_to_vmem [thread:$0]  %s361, 2048, %s363, [#allocation13], 128, 128, 8
        $region40: #{tpu_custom_call.1} parent=11 // pred_fallthru
          _
        // Predicated region
        $region41: #{tpu_custom_call.1} parent=11 // pred_check
          %p369 = pneg %p263
        $region42: #{tpu_custom_call.1} parent=11 // pred_check_branch
          %371 = sbr.rel (%p369) target = $region44
        $region43: #{tpu_custom_call.1} parent=11 // pred_region
          _
        $region44: #{tpu_custom_call.1} parent=11 // pred_fallthru
          _
      $region12: #{tpu_custom_call.1} parent=5 // pred_fallthru
        _
      %p372 = scmp.lt.s32.totalorder %s27, 2
      // Predicated region
      $region45: #{tpu_custom_call.1} parent=5 // pred_check
        %p373 = pneg %p372
      $region46: #{tpu_custom_call.1} parent=5 // pred_check_branch
        %375 = sbr.rel (%p373) target = $region48
      $region47: #{tpu_custom_call.1} parent=5 // pred_region
        // Predicated region
        $region49: #{tpu_custom_call.1} parent=47 // pred_check
          %p376 = pneg %p61
        $region50: #{tpu_custom_call.1} parent=47 // pred_check_branch
          %378 = sbr.rel (%p376) target = $region52
        $region51: #{tpu_custom_call.1} parent=47 // pred_region
          %s379 = sand.u32 %s51, 1
          %s380 = scalar_lea.sflag [#allocation4], %s379
          %s381 = sand.u32 %s51, 1
          %s382 = smul.addr %s381, 12
          %s383 = scalar_lea.vmem [#allocation3], %s382
          %385 = vsyncadd %s380, 0
          %s386 = smul.addr %s35, 3
          %s387 = smul.addr %s34, 3
          %s388 = sadd.s32 %s386, %s387
          %s389 = smul.addr %s388, 4
          %s390 = scalar_lea.hbm %s0, %s389
          %s391 = sshll.u32 %s390, 4
          %s392 = int_to_ptr.hbm [resolvable:$true] %s391
          %s393 = sshll.u32 %s383, 4
          %s394 = int_to_ptr.vmem [resolvable:$true] %s393
          %399 = dma.hbm_to_vmem [thread:$0]  %s392, 192, %s394, %s380, 64, 64, 4
        $region52: #{tpu_custom_call.1} parent=47 // pred_fallthru
          _
        // Predicated region
        $region53: #{tpu_custom_call.1} parent=47 // pred_check
          %p400 = pneg %p89
        $region54: #{tpu_custom_call.1} parent=47 // pred_check_branch
          %402 = sbr.rel (%p400) target = $region56
        $region55: #{tpu_custom_call.1} parent=47 // pred_region
          %s403 = sand.u32 %s27, 1
          %s404 = scalar_lea.sflag [#allocation7], %s403
          %s405 = sand.u32 %s79, 1
          %s406 = smul.addr %s405, 12
          %s407 = scalar_lea.vmem [#allocation6], %s406
          %409 = vsyncadd %s404, 0
          %s410 = smul.addr %s35, 3
          %s411 = smul.addr %s34, 3
          %s412 = sadd.s32 %s410, %s411
          %s413 = smul.addr %s412, 4
          %s414 = scalar_lea.hbm %s1, %s413
          %s415 = sshll.u32 %s414, 4
          %s416 = int_to_ptr.hbm [resolvable:$true] %s415
          %s417 = sshll.u32 %s407, 4
          %s418 = int_to_ptr.vmem [resolvable:$true] %s417
          %423 = dma.hbm_to_vmem [thread:$0]  %s416, 192, %s418, %s404, 64, 64, 4
        $region56: #{tpu_custom_call.1} parent=47 // pred_fallthru
          _
      $region48: #{tpu_custom_call.1} parent=5 // pred_fallthru
        _
      %p424 = scmp.le.s32.totalorder 1, %s27
      %p425 = scmp.lt.s32.totalorder %s27, 3
      %p426 = pnand %p424, %p425
      %p427 = pneg %p426
      // Predicated region
      $region57: #{tpu_custom_call.1} parent=5 // pred_check
        _
      $region58: #{tpu_custom_call.1} parent=5 // pred_check_branch
        %429 = sbr.rel (%p426) target = $region60
      $region59: #{tpu_custom_call.1} parent=5 // pred_region
        %s430 = ssub.s32 %s27, 1
        %s431 = sand.u32 %s54, 1
        %s432 = scalar_lea.sflag [#allocation4], %s431
        %s433 = sand.u32 %s54, 1
        %s434 = smul.addr %s433, 12
        %s435 = scalar_lea.vmem [#allocation3], %s434
        // Predicated region
        $region61: #{tpu_custom_call.1} parent=59 // pred_check
          %p436 = pneg %p67
        $region62: #{tpu_custom_call.1} parent=59 // pred_check_branch
          %438 = sbr.rel (%p436) target = $region64
        $region63: #{tpu_custom_call.1} parent=59 // pred_region
          %440 = dma.done %s432, 192
        $region64: #{tpu_custom_call.1} parent=59 // pred_fallthru
          _
        %s441 = sand.u32 %s32, 1
        %s442 = scalar_lea.sflag [#allocation7], %s441
        %s443 = sand.u32 %s82, 1
        %s444 = smul.addr %s443, 12
        %s445 = scalar_lea.vmem [#allocation6], %s444
        // Predicated region
        $region65: #{tpu_custom_call.1} parent=59 // pred_check
          %p446 = pneg %p95
        $region66: #{tpu_custom_call.1} parent=59 // pred_check_branch
          %448 = sbr.rel (%p446) target = $region68
        $region67: #{tpu_custom_call.1} parent=59 // pred_region
          %450 = dma.done %s442, 192
        $region68: #{tpu_custom_call.1} parent=59 // pred_fallthru
          _
        // Predicated region
        $region69: #{tpu_custom_call.1} parent=59 // pred_check
          %p451 = pneg %p116
        $region70: #{tpu_custom_call.1} parent=59 // pred_check_branch
          %453 = sbr.rel (%p451) target = $region72
        $region71: #{tpu_custom_call.1} parent=59 // pred_region
          %455 = dma.done [#allocation7], 1280
        $region72: #{tpu_custom_call.1} parent=59 // pred_fallthru
          _
        // Predicated region
        $region73: #{tpu_custom_call.1} parent=59 // pred_check
          %p456 = pneg %p158
        $region74: #{tpu_custom_call.1} parent=59 // pred_check_branch
          %458 = sbr.rel (%p456) target = $region76
        $region75: #{tpu_custom_call.1} parent=59 // pred_region
          %460 = dma.done [#allocation10], 16
        $region76: #{tpu_custom_call.1} parent=59 // pred_fallthru
          _
        // Predicated region
        $region77: #{tpu_custom_call.1} parent=59 // pred_check
          %p461 = pneg %p179
        $region78: #{tpu_custom_call.1} parent=59 // pred_check_branch
          %463 = sbr.rel (%p461) target = $region80
        $region79: #{tpu_custom_call.1} parent=59 // pred_region
          %465 = dma.done [#allocation10], 3072
        $region80: #{tpu_custom_call.1} parent=59 // pred_fallthru
          _
        // Predicated region
        $region81: #{tpu_custom_call.1} parent=59 // pred_check
          %p466 = pneg %p242
        $region82: #{tpu_custom_call.1} parent=59 // pred_check_branch
          %468 = sbr.rel (%p466) target = $region84
        $region83: #{tpu_custom_call.1} parent=59 // pred_region
          %470 = dma.done [#allocation13], 2048
        $region84: #{tpu_custom_call.1} parent=59 // pred_fallthru
          _
        %s471 = sand.u32 %s54, 1
        %s472 = scalar_lea.sflag [#allocation4], %s471
        %s473 = sand.u32 %s54, 1
        %s474 = smul.addr %s473, 12
        %s475 = scalar_lea.vmem [#allocation3], %s474
        %p476 = pneg %p67
        %p477 = pneg %p64
        %s478 = sand.u32 %s32, 1
        %s479 = scalar_lea.sflag [#allocation7], %s478
        %s480 = sand.u32 %s82, 1
        %s481 = smul.addr %s480, 12
        %s482 = scalar_lea.vmem [#allocation6], %s481
        %p483 = pneg %p95
        %p484 = pneg %p92
        %p485 = pneg %p116
        %p486 = pneg %p113
        %p487 = pneg %p137
        %p488 = pneg %p134
        %p489 = pneg %p158
        %p490 = pneg %p155
        %p491 = pneg %p179
        %p492 = pneg %p176
        %p493 = pneg %p200
        %p494 = pneg %p197
        %p495 = pneg %p221
        %p496 = pneg %p218
        %p497 = pneg %p242
        %p498 = pneg %p239
        %p499 = pneg %p263
        %p500 = pneg %p260
        %p501 = pneg %p291
        %p502 = pneg %p288
        %s503 = sand.u32 %s278, 1
        %s504 = scalar_lea.sflag [#allocation5], %s503
        %s505 = sand.u32 %s278, 1
        %s506 = smul.addr %s505, 16
        %s507 = scalar_lea.vmem [#allocation14], %s506
        %v509 = vld [vmem:[#allocation8] sm:$0xf]
        %v510 = vld [vmem:[#allocation8 + $0x4] sm:$0xf]
        %v511 = vld [vmem:[#allocation8 + $0x8] sm:$0xf]
        %v512 = vld [vmem:[#allocation8 + $0xc] sm:$0xf]
        %v513 = vld [vmem:[%s435] sm:$0xf]
        %v514 = vld [vmem:[%s435 + $0x4] sm:$0xf]
        %v515 = vld [vmem:[%s445] sm:$0xf]
        %v516 = vld [vmem:[%s445 + $0x4] sm:$0xf]
        %s517 = scalar_lea.vmem [#allocation8], 16
        %v518 = vld [vmem:[%s517] sm:$0xf]
        %v519 = vld [vmem:[%s517 + $0x4] sm:$0xf]
        %v520 = vld [vmem:[%s517 + $0x8] sm:$0xf]
        %v521 = vld [vmem:[%s517 + $0xc] sm:$0xf]
        %v524 = vunpack.c.l.b16 %v515
        %v525 = vunpack.c.l.b16 %v516
        %v526 = vpack.c.b16 %v525, %v524
        %v531 = vunpack.c.l.b16 %v518
        %v532 = vunpack.c.l.b16 %v519
        %v533 = vunpack.c.l.b16 %v520
        %v534 = vunpack.c.l.b16 %v521
        %v535 = vpack.c.b16 %v532, %v531
        %v536 = vpack.c.b16 %v534, %v533
        %vm539 = vcmask 261120
        %v541 = vsel %vm539, %v526, 0
        %543 = vmatpush.bf16.msra.mxu0 0
        %544 = vmatpush.bf16.msra.mxu0 0
        %545 = vmatpush.bf16.msra.mxu0 0
        %546 = vmatpush.bf16.msra.mxu0 0
        %547 = vmatpush.bf16.msra.mxu0 0
        %548 = vmatpush.bf16.msra.mxu0 0
        %549 = vmatpush.bf16.msra.mxu0 %v536
        %550 = vmatpush.bf16.msra.mxu0 %v535
        %551 = vmatmul.bf16.gmra.mxu0 %v541
        %v552 = vpop.f32.mrf.mxu0
        %v553 = vadd.f32 0.0, %v552
        %v554 = vpop.f32.mrf.mxu0
        %v555 = vadd.f32 0.0, %v554
        %556 = vdwg.mxu0
        %v559 = vunpack.c.l.b16 %v513
        %v560 = vunpack.c.l.b16 %v514
        %v561 = vpack.c.b16 %v560, %v559
        %v566 = vunpack.c.l.b16 %v509
        %v567 = vunpack.c.l.b16 %v510
        %v568 = vunpack.c.l.b16 %v511
        %v569 = vunpack.c.l.b16 %v512
        %v570 = vpack.c.b16 %v567, %v566
        %v571 = vpack.c.b16 %v569, %v568
        %v575 = vsel %vm539, %v561, 0
        %577 = vmatpush.bf16.msra.mxu0 0
        %578 = vmatpush.bf16.msra.mxu0 0
        %579 = vmatpush.bf16.msra.mxu0 0
        %580 = vmatpush.bf16.msra.mxu0 0
        %581 = vmatpush.bf16.msra.mxu0 0
        %582 = vmatpush.bf16.msra.mxu0 0
        %583 = vmatpush.bf16.msra.mxu0 %v571
        %584 = vmatpush.bf16.msra.mxu0 %v570
        %585 = vmatmul.bf16.gmra.mxu0 %v575
        %v586 = vpop.f32.mrf.mxu0
        %v587 = vadd.f32 %v553, %v586
        %v588 = vpop.f32.mrf.mxu0
        %v589 = vadd.f32 %v555, %v588
        %590 = vdwg.mxu0
        %v591 = vld [vmem:[%s435] sm:$0xf]
        %v592 = vld [vmem:[%s435 + $0x4] sm:$0xf]
        %v593 = vld [vmem:[%s435 + $0x8] sm:$0x1]
        %v597 = vunpack.c.l.b16 %v591
        %v598 = vunpack.c.l.b16 %v592
        %v599 = vunpack.c.l.b16 %v593
        %v600 = vpack.c.b16 %v598, %v597
        %v601 = vpack.c.b16 %v599, %v599
        %vm602 = vsmask.f32 7424
        %v604 = vshrl.u32 %v600, 16
        %v606 = vshll.u32 %v600, 16
        %v608 = vrot.slane %v606, 1
        %v609 = vor.u32 %v604, %v608
        %v611 = vshll.u32 %v601, 16
        %v613 = vrot.slane %v611, 1
        %v614 = vsel %vm602, %v609, %v613
        %v616 = vsel %vm539, %v614, 0
        %618 = vmatpush.bf16.msra.mxu0 0
        %619 = vmatpush.bf16.msra.mxu0 0
        %620 = vmatpush.bf16.msra.mxu0 0
        %621 = vmatpush.bf16.msra.mxu0 0
        %622 = vmatpush.bf16.msra.mxu0 0
        %623 = vmatpush.bf16.msra.mxu0 0
        %624 = vmatpush.bf16.msra.mxu0 %v536
        %625 = vmatpush.bf16.msra.mxu0 %v535
        %626 = vmatmul.bf16.gmra.mxu0 %v616
        %v627 = vpop.f32.mrf.mxu0
        %v628 = vadd.f32 0.0, %v627
        %v629 = vpop.f32.mrf.mxu0
        %v630 = vadd.f32 0.0, %v629
        %631 = vdwg.mxu0
        %632 = vmatpush.bf16.msra.mxu0 0
        %633 = vmatpush.bf16.msra.mxu0 0
        %634 = vmatpush.bf16.msra.mxu0 0
        %635 = vmatpush.bf16.msra.mxu0 0
        %636 = vmatpush.bf16.msra.mxu0 0
        %637 = vmatpush.bf16.msra.mxu0 0
        %638 = vmatpush.bf16.msra.mxu0 %v571
        %639 = vmatpush.bf16.msra.mxu0 %v570
        %640 = vmatmul.bf16.gmra.mxu0 %v541
        %v641 = vpop.f32.mrf.mxu0
        %v642 = vadd.f32 %v628, %v641
        %v643 = vpop.f32.mrf.mxu0
        %v644 = vadd.f32 %v630, %v643
        %645 = vdwg.mxu0
        %s646 = scalar_lea.vmem [#allocation8], 32
        %v647 = vld [vmem:[%s646] sm:$0xf]
        %v648 = vld [vmem:[%s646 + $0x4] sm:$0xf]
        %v649 = vld [vmem:[%s646 + $0x8] sm:$0xf]
        %v650 = vld [vmem:[%s646 + $0xc] sm:$0xf]
        %v655 = vunpack.c.l.b16 %v647
        %v656 = vunpack.c.l.b16 %v648
        %v657 = vunpack.c.l.b16 %v649
        %v658 = vunpack.c.l.b16 %v650
        %v659 = vpack.c.b16 %v656, %v655
        %v660 = vpack.c.b16 %v658, %v657
        %663 = vmatpush.bf16.msra.mxu0 0
        %664 = vmatpush.bf16.msra.mxu0 0
        %665 = vmatpush.bf16.msra.mxu0 0
        %666 = vmatpush.bf16.msra.mxu0 0
        %667 = vmatpush.bf16.msra.mxu0 0
        %668 = vmatpush.bf16.msra.mxu0 0
        %669 = vmatpush.bf16.msra.mxu0 %v660
        %670 = vmatpush.bf16.msra.mxu0 %v659
        %671 = vmatmul.bf16.gmra.mxu0 %v616
        %v672 = vpop.f32.mrf.mxu0
        %v673 = vadd.f32 0.0, %v672
        %v674 = vpop.f32.mrf.mxu0
        %v675 = vadd.f32 0.0, %v674
        %676 = vdwg.mxu0
        %v677 = vadd.f32 %v587, %v673
        %v678 = vadd.f32 %v589, %v675
        %v679 = vld [vmem:[%s445] sm:$0xf]
        %v680 = vld [vmem:[%s445 + $0x4] sm:$0xf]
        %v681 = vld [vmem:[%s445 + $0x8] sm:$0x1]
        %v685 = vunpack.c.l.b16 %v679
        %v686 = vunpack.c.l.b16 %v680
        %v687 = vunpack.c.l.b16 %v681
        %v688 = vpack.c.b16 %v686, %v685
        %v689 = vpack.c.b16 %v687, %v687
        %v691 = vshrl.u32 %v688, 16
        %v693 = vshll.u32 %v688, 16
        %v695 = vrot.slane %v693, 1
        %v696 = vor.u32 %v691, %v695
        %v698 = vshll.u32 %v689, 16
        %v700 = vrot.slane %v698, 1
        %v701 = vsel %vm602, %v696, %v700
        %v703 = vsel %vm539, %v701, 0
        %705 = vmatpush.bf16.msra.mxu0 0
        %706 = vmatpush.bf16.msra.mxu0 0
        %707 = vmatpush.bf16.msra.mxu0 0
        %708 = vmatpush.bf16.msra.mxu0 0
        %709 = vmatpush.bf16.msra.mxu0 0
        %710 = vmatpush.bf16.msra.mxu0 0
        %711 = vmatpush.bf16.msra.mxu0 %v660
        %712 = vmatpush.bf16.msra.mxu0 %v659
        %713 = vmatmul.bf16.gmra.mxu0 %v703
        %v714 = vpop.f32.mrf.mxu0
        %v715 = vadd.f32 0.0, %v714
        %v716 = vpop.f32.mrf.mxu0
        %v717 = vadd.f32 0.0, %v716
        %718 = vdwg.mxu0
        %v719 = vadd.f32 %v642, %v715
        %v720 = vadd.f32 %v644, %v717
        %s721 = scalar_lea.vmem [#allocation8], 48
        %v722 = vld [vmem:[%s721] sm:$0xf]
        %v723 = vld [vmem:[%s721 + $0x4] sm:$0xf]
        %v724 = vld [vmem:[%s721 + $0x8] sm:$0xf]
        %v725 = vld [vmem:[%s721 + $0xc] sm:$0xf]
        %v730 = vunpack.c.l.b16 %v722
        %v731 = vunpack.c.l.b16 %v723
        %v732 = vunpack.c.l.b16 %v724
        %v733 = vunpack.c.l.b16 %v725
        %v734 = vpack.c.b16 %v731, %v730
        %v735 = vpack.c.b16 %v733, %v732
        %738 = vmatpush.bf16.msra.mxu0 0
        %739 = vmatpush.bf16.msra.mxu0 0
        %740 = vmatpush.bf16.msra.mxu0 0
        %741 = vmatpush.bf16.msra.mxu0 0
        %742 = vmatpush.bf16.msra.mxu0 0
        %743 = vmatpush.bf16.msra.mxu0 0
        %744 = vmatpush.bf16.msra.mxu0 %v735
        %745 = vmatpush.bf16.msra.mxu0 %v734
        %746 = vmatmul.bf16.gmra.mxu0 %v703
        %v747 = vpop.f32.mrf.mxu0
        %v748 = vadd.f32 0.0, %v747
        %v749 = vpop.f32.mrf.mxu0
        %v750 = vadd.f32 0.0, %v749
        %751 = vdwg.mxu0
        %v752 = vadd.f32 %v677, %v748
        %v753 = vadd.f32 %v678, %v750
        %v754 = vld [vmem:[%s435] sm:$0xe]
        %v756 = vunpack.c.l.b16 %v754
        %v757 = vpack.c.b16 %v598, %v756
        %vm758 = vcmask 1046528
        %v759 = vrot.slane %v757, 1
        %v760 = vrot.slane %v601, 1
        %v761 = vsel %vm758, %v759, %v760
        %v763 = vsel %vm539, %v761, 0
        %765 = vmatpush.bf16.msra.mxu0 0
        %766 = vmatpush.bf16.msra.mxu0 0
        %767 = vmatpush.bf16.msra.mxu0 0
        %768 = vmatpush.bf16.msra.mxu0 0
        %769 = vmatpush.bf16.msra.mxu0 0
        %770 = vmatpush.bf16.msra.mxu0 0
        %771 = vmatpush.bf16.msra.mxu0 %v735
        %772 = vmatpush.bf16.msra.mxu0 %v734
        %773 = vmatmul.bf16.gmra.mxu0 %v763
        %v774 = vpop.f32.mrf.mxu0
        %v775 = vadd.f32 0.0, %v774
        %v776 = vpop.f32.mrf.mxu0
        %v777 = vadd.f32 0.0, %v776
        %778 = vdwg.mxu0
        %v779 = vadd.f32 %v719, %v775
        %v780 = vadd.f32 %v720, %v777
        %s781 = scalar_lea.vmem [#allocation8], 64
        %v782 = vld [vmem:[%s781] sm:$0xf]
        %v783 = vld [vmem:[%s781 + $0x4] sm:$0xf]
        %v784 = vld [vmem:[%s781 + $0x8] sm:$0xf]
        %v785 = vld [vmem:[%s781 + $0xc] sm:$0xf]
        %v790 = vunpack.c.l.b16 %v782
        %v791 = vunpack.c.l.b16 %v783
        %v792 = vunpack.c.l.b16 %v784
        %v793 = vunpack.c.l.b16 %v785
        %v794 = vpack.c.b16 %v791, %v790
        %v795 = vpack.c.b16 %v793, %v792
        %798 = vmatpush.bf16.msra.mxu0 0
        %799 = vmatpush.bf16.msra.mxu0 0
        %800 = vmatpush.bf16.msra.mxu0 0
        %801 = vmatpush.bf16.msra.mxu0 0
        %802 = vmatpush.bf16.msra.mxu0 0
        %803 = vmatpush.bf16.msra.mxu0 0
        %804 = vmatpush.bf16.msra.mxu0 %v795
        %805 = vmatpush.bf16.msra.mxu0 %v794
        %806 = vmatmul.bf16.gmra.mxu0 %v763
        %v807 = vpop.f32.mrf.mxu0
        %v808 = vadd.f32 0.0, %v807
        %v809 = vpop.f32.mrf.mxu0
        %v810 = vadd.f32 0.0, %v809
        %811 = vdwg.mxu0
        %v812 = vadd.f32 %v752, %v808
        %v813 = vadd.f32 %v753, %v810
        %v814 = vld [vmem:[%s445] sm:$0xe]
        %v816 = vunpack.c.l.b16 %v814
        %v817 = vpack.c.b16 %v686, %v816
        %v818 = vrot.slane %v817, 1
        %v819 = vrot.slane %v689, 1
        %v820 = vsel %vm758, %v818, %v819
        %v822 = vsel %vm539, %v820, 0
        %824 = vmatpush.bf16.msra.mxu0 0
        %825 = vmatpush.bf16.msra.mxu0 0
        %826 = vmatpush.bf16.msra.mxu0 0
        %827 = vmatpush.bf16.msra.mxu0 0
        %828 = vmatpush.bf16.msra.mxu0 0
        %829 = vmatpush.bf16.msra.mxu0 0
        %830 = vmatpush.bf16.msra.mxu0 %v795
        %831 = vmatpush.bf16.msra.mxu0 %v794
        %832 = vmatmul.bf16.gmra.mxu0 %v822
        %v833 = vpop.f32.mrf.mxu0
        %v834 = vadd.f32 0.0, %v833
        %v835 = vpop.f32.mrf.mxu0
        %v836 = vadd.f32 0.0, %v835
        %837 = vdwg.mxu0
        %v838 = vadd.f32 %v779, %v834
        %v839 = vadd.f32 %v780, %v836
        %v840 = vld [vmem:[%s3] sm:$0x1]
        %v842 = vperm.slane %v840, 0
        %v844 = vmul.f32 %v812, %v842
        %v845 = vmul.f32 %v813, %v842
        %v846 = vld [vmem:[#allocation9] sm:$0x1]
        %v848 = vperm.slane %v846, 0
        %v850 = vadd.f32 %v844, %v848
        %v851 = vadd.f32 %v845, %v848
        %v852 = vmax.f32 %v850, 0.0
        %v853 = vmax.f32 %v851, 0.0
        %v854 = vmul.f32 %v838, %v842
        %v855 = vmul.f32 %v839, %v842
        %v856 = vadd.f32 %v854, %v848
        %v857 = vadd.f32 %v855, %v848
        %v858 = vmax.f32 %v856, 0.0
        %v859 = vmax.f32 %v857, 0.0
        %862 = vrot.lane.b32.xlu0 %v858, 64
        %v863 = vpop.permute.xlu0 %862
        %864 = vrot.lane.b32.xlu0 %v859, 64
        %v865 = vpop.permute.xlu0 %864
        %vm868 = vcmask 523264
        %v869 = vsel %vm868, %v852, %v863
        %v870 = vsel %vm868, %v853, %v865
        %v871 = vpack.c.bf16 %v869, %v869
        %v872 = vpack.c.bf16 %v870, %v870
        %873 = vst [vmem:[#allocation2] sm:$0xf] %v871
        %874 = vst [vmem:[#allocation2 + $0x4] sm:$0xf] %v872
        %p875 = scmp.eq.s32.totalorder %s37, 0
        // Predicated region
        $region85: #{tpu_custom_call.1} parent=59 // pred_check
          %p876 = pneg %p875
        $region86: #{tpu_custom_call.1} parent=59 // pred_check_branch
          %878 = sbr.rel (%p876) target = $region88
        $region87: #{tpu_custom_call.1} parent=59 // pred_region
          %879 = vst [vmem:[#allocation2] sm:$0x1] 0
        $region88: #{tpu_custom_call.1} parent=59 // pred_fallthru
          _
        %v880 = vld [vmem:[#allocation2] sm:$0xf]
        %v881 = vld [vmem:[#allocation11] sm:$0xf]
        %v882 = vld [vmem:[#allocation11 + $0x4] sm:$0xf]
        %v883 = vld [vmem:[#allocation11 + $0x8] sm:$0xf]
        %v884 = vld [vmem:[#allocation11 + $0xc] sm:$0xf]
        %v885 = vld [vmem:[#allocation11 + $0x10] sm:$0xf]
        %v886 = vld [vmem:[#allocation11 + $0x14] sm:$0xf]
        %v887 = vld [vmem:[#allocation11 + $0x18] sm:$0xf]
        %v888 = vld [vmem:[#allocation11 + $0x1c] sm:$0xf]
        %v889 = vld [vmem:[#allocation11 + $0x20] sm:$0xf]
        %v890 = vld [vmem:[#allocation11 + $0x24] sm:$0xf]
        %v891 = vld [vmem:[#allocation11 + $0x28] sm:$0xf]
        %v892 = vld [vmem:[#allocation11 + $0x2c] sm:$0xf]
        %v893 = vld [vmem:[#allocation11 + $0x30] sm:$0xf]
        %v894 = vld [vmem:[#allocation11 + $0x34] sm:$0xf]
        %v895 = vld [vmem:[#allocation11 + $0x38] sm:$0xf]
        %v896 = vld [vmem:[#allocation11 + $0x3c] sm:$0xf]
        %v897 = vld [vmem:[#allocation2] sm:$0xf]
        %v898 = vld [vmem:[#allocation2 + $0x4] sm:$0x1]
        %s899 = scalar_lea.vmem [#allocation11], 64
        %v900 = vld [vmem:[%s899] sm:$0xf]
        %v901 = vld [vmem:[%s899 + $0x4] sm:$0xf]
        %v902 = vld [vmem:[%s899 + $0x8] sm:$0xf]
        %v903 = vld [vmem:[%s899 + $0xc] sm:$0xf]
        %v904 = vld [vmem:[%s899 + $0x10] sm:$0xf]
        %v905 = vld [vmem:[%s899 + $0x14] sm:$0xf]
        %v906 = vld [vmem:[%s899 + $0x18] sm:$0xf]
        %v907 = vld [vmem:[%s899 + $0x1c] sm:$0xf]
        %v908 = vld [vmem:[%s899 + $0x20] sm:$0xf]
        %v909 = vld [vmem:[%s899 + $0x24] sm:$0xf]
        %v910 = vld [vmem:[%s899 + $0x28] sm:$0xf]
        %v911 = vld [vmem:[%s899 + $0x2c] sm:$0xf]
        %v912 = vld [vmem:[%s899 + $0x30] sm:$0xf]
        %v913 = vld [vmem:[%s899 + $0x34] sm:$0xf]
        %v914 = vld [vmem:[%s899 + $0x38] sm:$0xf]
        %v915 = vld [vmem:[%s899 + $0x3c] sm:$0xf]
        %v918 = vunpack.c.l.b16 %v897
        %v919 = vunpack.c.l.b16 %v898
        %v920 = vpack.c.b16 %v919, %v918
        %v922 = vshrl.u32 %v920, 16
        %v924 = vshll.u32 %v920, 16
        %v926 = vrot.slane %v924, 1
        %v927 = vor.u32 %v922, %v926
        %v945 = vunpack.c.l.b16 %v900
        %v946 = vunpack.c.l.b16 %v901
        %v947 = vunpack.c.l.b16 %v902
        %v948 = vunpack.c.l.b16 %v903
        %v949 = vunpack.c.l.b16 %v904
        %v950 = vunpack.c.l.b16 %v905
        %v951 = vunpack.c.l.b16 %v906
        %v952 = vunpack.c.l.b16 %v907
        %v953 = vunpack.c.l.b16 %v908
        %v954 = vunpack.c.l.b16 %v909
        %v955 = vunpack.c.l.b16 %v910
        %v956 = vunpack.c.l.b16 %v911
        %v957 = vunpack.c.l.b16 %v912
        %v958 = vunpack.c.l.b16 %v913
        %v959 = vunpack.c.l.b16 %v914
        %v960 = vunpack.c.l.b16 %v915
        %v961 = vpack.c.b16 %v946, %v945
        %v962 = vpack.c.b16 %v948, %v947
        %v963 = vpack.c.b16 %v950, %v949
        %v964 = vpack.c.b16 %v952, %v951
        %v965 = vpack.c.b16 %v954, %v953
        %v966 = vpack.c.b16 %v956, %v955
        %v967 = vpack.c.b16 %v958, %v957
        %v968 = vpack.c.b16 %v960, %v959
        %977 = vmatpush.bf16.msra.mxu0 %v968
        %978 = vmatpush.bf16.msra.mxu0 %v967
        %979 = vmatpush.bf16.msra.mxu0 %v966
        %980 = vmatpush.bf16.msra.mxu0 %v965
        %981 = vmatpush.bf16.msra.mxu0 %v964
        %982 = vmatpush.bf16.msra.mxu0 %v963
        %983 = vmatpush.bf16.msra.mxu0 %v962
        %984 = vmatpush.bf16.msra.mxu0 %v961
        %985 = vmatmul.bf16.gmra.mxu0 %v927
        %v986 = vpop.f32.mrf.mxu0
        %v987 = vadd.f32 0.0, %v986
        %v988 = vpop.f32.mrf.mxu0
        %989 = vdwg.mxu0
        %v1006 = vunpack.c.l.b16 %v881
        %v1007 = vunpack.c.l.b16 %v882
        %v1008 = vunpack.c.l.b16 %v883
        %v1009 = vunpack.c.l.b16 %v884
        %v1010 = vunpack.c.l.b16 %v885
        %v1011 = vunpack.c.l.b16 %v886
        %v1012 = vunpack.c.l.b16 %v887
        %v1013 = vunpack.c.l.b16 %v888
        %v1014 = vunpack.c.l.b16 %v889
        %v1015 = vunpack.c.l.b16 %v890
        %v1016 = vunpack.c.l.b16 %v891
        %v1017 = vunpack.c.l.b16 %v892
        %v1018 = vunpack.c.l.b16 %v893
        %v1019 = vunpack.c.l.b16 %v894
        %v1020 = vunpack.c.l.b16 %v895
        %v1021 = vunpack.c.l.b16 %v896
        %v1022 = vpack.c.b16 %v1007, %v1006
        %v1023 = vpack.c.b16 %v1009, %v1008
        %v1024 = vpack.c.b16 %v1011, %v1010
        %v1025 = vpack.c.b16 %v1013, %v1012
        %v1026 = vpack.c.b16 %v1015, %v1014
        %v1027 = vpack.c.b16 %v1017, %v1016
        %v1028 = vpack.c.b16 %v1019, %v1018
        %v1029 = vpack.c.b16 %v1021, %v1020
        %1038 = vmatpush.bf16.msra.mxu0 %v1029
        %1039 = vmatpush.bf16.msra.mxu0 %v1028
        %1040 = vmatpush.bf16.msra.mxu0 %v1027
        %1041 = vmatpush.bf16.msra.mxu0 %v1026
        %1042 = vmatpush.bf16.msra.mxu0 %v1025
        %1043 = vmatpush.bf16.msra.mxu0 %v1024
        %1044 = vmatpush.bf16.msra.mxu0 %v1023
        %1045 = vmatpush.bf16.msra.mxu0 %v1022
        %1046 = vmatmul.bf16.gmra.mxu0 %v880
        %v1047 = vpop.f32.mrf.mxu0
        %v1048 = vadd.f32 %v987, %v1047
        %v1049 = vpop.f32.mrf.mxu0
        %1050 = vdwg.mxu0
        %v1051 = vld [vmem:[#allocation2] sm:$0xe]
        %s1052 = scalar_lea.vmem [#allocation11], 128
        %v1053 = vld [vmem:[%s1052] sm:$0xf]
        %v1054 = vld [vmem:[%s1052 + $0x4] sm:$0xf]
        %v1055 = vld [vmem:[%s1052 + $0x8] sm:$0xf]
        %v1056 = vld [vmem:[%s1052 + $0xc] sm:$0xf]
        %v1057 = vld [vmem:[%s1052 + $0x10] sm:$0xf]
        %v1058 = vld [vmem:[%s1052 + $0x14] sm:$0xf]
        %v1059 = vld [vmem:[%s1052 + $0x18] sm:$0xf]
        %v1060 = vld [vmem:[%s1052 + $0x1c] sm:$0xf]
        %v1061 = vld [vmem:[%s1052 + $0x20] sm:$0xf]
        %v1062 = vld [vmem:[%s1052 + $0x24] sm:$0xf]
        %v1063 = vld [vmem:[%s1052 + $0x28] sm:$0xf]
        %v1064 = vld [vmem:[%s1052 + $0x2c] sm:$0xf]
        %v1065 = vld [vmem:[%s1052 + $0x30] sm:$0xf]
        %v1066 = vld [vmem:[%s1052 + $0x34] sm:$0xf]
        %v1067 = vld [vmem:[%s1052 + $0x38] sm:$0xf]
        %v1068 = vld [vmem:[%s1052 + $0x3c] sm:$0xf]
        %v1070 = vunpack.c.l.b16 %v1051
        %v1071 = vpack.c.b16 %v919, %v1070
        %v1072 = vrot.slane %v1071, 1
        %v1090 = vunpack.c.l.b16 %v1053
        %v1091 = vunpack.c.l.b16 %v1054
        %v1092 = vunpack.c.l.b16 %v1055
        %v1093 = vunpack.c.l.b16 %v1056
        %v1094 = vunpack.c.l.b16 %v1057
        %v1095 = vunpack.c.l.b16 %v1058
        %v1096 = vunpack.c.l.b16 %v1059
        %v1097 = vunpack.c.l.b16 %v1060
        %v1098 = vunpack.c.l.b16 %v1061
        %v1099 = vunpack.c.l.b16 %v1062
        %v1100 = vunpack.c.l.b16 %v1063
        %v1101 = vunpack.c.l.b16 %v1064
        %v1102 = vunpack.c.l.b16 %v1065
        %v1103 = vunpack.c.l.b16 %v1066
        %v1104 = vunpack.c.l.b16 %v1067
        %v1105 = vunpack.c.l.b16 %v1068
        %v1106 = vpack.c.b16 %v1091, %v1090
        %v1107 = vpack.c.b16 %v1093, %v1092
        %v1108 = vpack.c.b16 %v1095, %v1094
        %v1109 = vpack.c.b16 %v1097, %v1096
        %v1110 = vpack.c.b16 %v1099, %v1098
        %v1111 = vpack.c.b16 %v1101, %v1100
        %v1112 = vpack.c.b16 %v1103, %v1102
        %v1113 = vpack.c.b16 %v1105, %v1104
        %1122 = vmatpush.bf16.msra.mxu0 %v1113
        %1123 = vmatpush.bf16.msra.mxu0 %v1112
        %1124 = vmatpush.bf16.msra.mxu0 %v1111
        %1125 = vmatpush.bf16.msra.mxu0 %v1110
        %1126 = vmatpush.bf16.msra.mxu0 %v1109
        %1127 = vmatpush.bf16.msra.mxu0 %v1108
        %1128 = vmatpush.bf16.msra.mxu0 %v1107
        %1129 = vmatpush.bf16.msra.mxu0 %v1106
        %1130 = vmatmul.bf16.gmra.mxu0 %v1072
        %v1131 = vpop.f32.mrf.mxu0
        %v1132 = vadd.f32 0.0, %v1131
        %v1133 = vpop.f32.mrf.mxu0
        %1134 = vdwg.mxu0
        %v1135 = vadd.f32 %v1048, %v1132
        %v1136 = vld [vmem:[%s6] sm:$0x1]
        %v1138 = vperm.slane %v1136, 0
        %v1140 = vmul.f32 %v1135, %v1138
        %v1141 = vld [vmem:[%s7] sm:$0x1]
        %v1143 = vperm.slane %v1141, 0
        %v1145 = vadd.f32 %v1140, %v1143
        %v1146 = vmax.f32 %v1145, 0.0
        %v1147 = vpack.c.bf16 %v1146, %v1146
        %v1148 = vld [vmem:[#allocation12] sm:$0xff]
        %v1149 = vld [vmem:[#allocation12 + $0x8] sm:$0xff]
        %v1150 = vld [vmem:[#allocation12 + $0x10] sm:$0xff]
        %v1151 = vld [vmem:[#allocation12 + $0x18] sm:$0xff]
        %v1152 = vld [vmem:[#allocation12 + $0x20] sm:$0xff]
        %v1153 = vld [vmem:[#allocation12 + $0x28] sm:$0xff]
        %v1154 = vld [vmem:[#allocation12 + $0x30] sm:$0xff]
        %v1155 = vld [vmem:[#allocation12 + $0x38] sm:$0xff]
        %v1156 = vld [vmem:[#allocation12 + $0x40] sm:$0xff]
        %v1157 = vld [vmem:[#allocation12 + $0x48] sm:$0xff]
        %v1158 = vld [vmem:[#allocation12 + $0x50] sm:$0xff]
        %v1159 = vld [vmem:[#allocation12 + $0x58] sm:$0xff]
        %v1160 = vld [vmem:[#allocation12 + $0x60] sm:$0xff]
        %v1161 = vld [vmem:[#allocation12 + $0x68] sm:$0xff]
        %v1162 = vld [vmem:[#allocation12 + $0x70] sm:$0xff]
        %v1163 = vld [vmem:[#allocation12 + $0x78] sm:$0xff]
        %v1164 = vld [vmem:[%s9] sm:$0x3]
        %v1166 = vperm.slane %v1164, 0
        %v1167 = vperm.slane %v1164, 1
        %v1186 = vunpack.c.l.b16 %v1148
        %v1187 = vunpack.c.h.b16 %v1148
        %v1188 = vunpack.c.l.b16 %v1149
        %v1189 = vunpack.c.h.b16 %v1149
        %v1190 = vunpack.c.l.b16 %v1150
        %v1191 = vunpack.c.h.b16 %v1150
        %v1192 = vunpack.c.l.b16 %v1151
        %v1193 = vunpack.c.h.b16 %v1151
        %v1194 = vunpack.c.l.b16 %v1152
        %v1195 = vunpack.c.h.b16 %v1152
        %v1196 = vunpack.c.l.b16 %v1153
        %v1197 = vunpack.c.h.b16 %v1153
        %v1198 = vunpack.c.l.b16 %v1154
        %v1199 = vunpack.c.h.b16 %v1154
        %v1200 = vunpack.c.l.b16 %v1155
        %v1201 = vunpack.c.h.b16 %v1155
        %v1202 = vunpack.c.l.b16 %v1156
        %v1203 = vunpack.c.h.b16 %v1156
        %v1204 = vunpack.c.l.b16 %v1157
        %v1205 = vunpack.c.h.b16 %v1157
        %v1206 = vunpack.c.l.b16 %v1158
        %v1207 = vunpack.c.h.b16 %v1158
        %v1208 = vunpack.c.l.b16 %v1159
        %v1209 = vunpack.c.h.b16 %v1159
        %v1210 = vunpack.c.l.b16 %v1160
        %v1211 = vunpack.c.h.b16 %v1160
        %v1212 = vunpack.c.l.b16 %v1161
        %v1213 = vunpack.c.h.b16 %v1161
        %v1214 = vunpack.c.l.b16 %v1162
        %v1215 = vunpack.c.h.b16 %v1162
        %v1216 = vunpack.c.l.b16 %v1163
        %v1217 = vunpack.c.h.b16 %v1163
        %v1218 = vpack.c.b16 %v1188, %v1186
        %v1219 = vpack.c.b16 %v1189, %v1187
        %v1220 = vpack.c.b16 %v1192, %v1190
        %v1221 = vpack.c.b16 %v1193, %v1191
        %v1222 = vpack.c.b16 %v1196, %v1194
        %v1223 = vpack.c.b16 %v1197, %v1195
        %v1224 = vpack.c.b16 %v1200, %v1198
        %v1225 = vpack.c.b16 %v1201, %v1199
        %v1226 = vpack.c.b16 %v1204, %v1202
        %v1227 = vpack.c.b16 %v1205, %v1203
        %v1228 = vpack.c.b16 %v1208, %v1206
        %v1229 = vpack.c.b16 %v1209, %v1207
        %v1230 = vpack.c.b16 %v1212, %v1210
        %v1231 = vpack.c.b16 %v1213, %v1211
        %v1232 = vpack.c.b16 %v1216, %v1214
        %v1233 = vpack.c.b16 %v1217, %v1215
        %1250 = vmatpush.bf16.msra.mxu0 %v1232
        %1251 = vmatpush.bf16.msra.mxu0 %v1230
        %1252 = vmatpush.bf16.msra.mxu0 %v1228
        %1253 = vmatpush.bf16.msra.mxu0 %v1226
        %1254 = vmatpush.bf16.msra.mxu0 %v1224
        %1255 = vmatpush.bf16.msra.mxu0 %v1222
        %1256 = vmatpush.bf16.msra.mxu0 %v1220
        %1257 = vmatpush.bf16.msra.mxu0 %v1218
        %1258 = vmatmul.bf16.gmra.mxu0 %v1147
        %v1259 = vpop.f32.mrf.mxu0
        %v1260 = vadd.f32 %v1166, %v1259
        %v1261 = vpop.f32.mrf.mxu0
        %1262 = vdwg.mxu0
        %1263 = vmatpush.bf16.msra.mxu0 %v1233
        %1264 = vmatpush.bf16.msra.mxu0 %v1231
        %1265 = vmatpush.bf16.msra.mxu0 %v1229
        %1266 = vmatpush.bf16.msra.mxu0 %v1227
        %1267 = vmatpush.bf16.msra.mxu0 %v1225
        %1268 = vmatpush.bf16.msra.mxu0 %v1223
        %1269 = vmatpush.bf16.msra.mxu0 %v1221
        %1270 = vmatpush.bf16.msra.mxu0 %v1219
        %1271 = vmatmul.bf16.gmra.mxu0 %v1147
        %v1272 = vpop.f32.mrf.mxu0
        %v1273 = vadd.f32 %v1167, %v1272
        %v1274 = vpop.f32.mrf.mxu0
        %1275 = vdwg.mxu0
        %1276 = vst [vmem:[%s507] sm:$0xff] %v1260
        %1277 = vst [vmem:[%s507 + $0x8] sm:$0xff] %v1273
        %s1278 = sand.u32 %s278, 1
        %s1279 = scalar_lea.sflag [#allocation5], %s1278
        %s1280 = sand.u32 %s278, 1
        %s1281 = smul.addr %s1280, 16
        %s1282 = scalar_lea.vmem [#allocation14], %s1281
        // Predicated region
        $region89: #{tpu_custom_call.1} parent=59 // pred_check
          %p1283 = pneg %p288
        $region90: #{tpu_custom_call.1} parent=59 // pred_check_branch
          %1285 = sbr.rel (%p1283) target = $region92
        $region91: #{tpu_custom_call.1} parent=59 // pred_region
          %1287 = vsyncadd %s1279, 0
          %s1288 = smul.addr %s37, 2
          %s1289 = smul.addr %s36, 2
          %s1290 = sadd.s32 %s1288, %s1289
          %s1291 = smul.addr %s1290, 8
          %s1292 = scalar_lea.hbm %s10, %s1291
          %s1294 = sshll.u32 %s1282, 4
          %s1295 = int_to_ptr.vmem [resolvable:$true] %s1294
          %s1296 = sshll.u32 %s1292, 4
          %s1297 = int_to_ptr.hbm [resolvable:$true] %s1296
          %1299 = dma.vmem_to_hbm [thread:$0]  %s1295, 256, %s1297, %s1279
        $region92: #{tpu_custom_call.1} parent=59 // pred_fallthru
          _
      $region60: #{tpu_custom_call.1} parent=5 // pred_fallthru
        _
      %p1300 = scmp.le.s32.totalorder 2, %s27
      // Predicated region
      $region93: #{tpu_custom_call.1} parent=5 // pred_check
        %p1301 = pneg %p1300
      $region94: #{tpu_custom_call.1} parent=5 // pred_check_branch
        %1303 = sbr.rel (%p1301) target = $region96
      $region95: #{tpu_custom_call.1} parent=5 // pred_region
        %s1304 = ssub.s32 %s27, 2
        // Predicated region
        $region97: #{tpu_custom_call.1} parent=95 // pred_check
          %p1305 = pneg %p294
        $region98: #{tpu_custom_call.1} parent=95 // pred_check_branch
          %1307 = sbr.rel (%p1305) target = $region100
        $region99: #{tpu_custom_call.1} parent=95 // pred_region
          %s1308 = sand.u32 %s279, 1
          %s1309 = scalar_lea.sflag [#allocation5], %s1308
          %s1310 = sand.u32 %s279, 1
          %s1311 = smul.addr %s1310, 16
          %s1312 = scalar_lea.vmem [#allocation14], %s1311
          %1314 = dma.done %s1309, 256
        $region100: #{tpu_custom_call.1} parent=95 // pred_fallthru
          _
      $region96: #{tpu_custom_call.1} parent=5 // pred_fallthru
        _
    $region6: #{tpu_custom_call.1} parent=1 // loop_footer
      %s31 = sadd.s32 1, %s27
    $region7: #{tpu_custom_call.1} parent=1 // loop_footer_branch
      %26 = sbr.rel target = $region3
    $region8: #{tpu_custom_call.1} parent=1 // loop_exit
      _
    %1315 = vsyncpa [#allocation4], 1
    %s1316 = scalar_lea.sflag [#allocation4], 1
    %1317 = vsyncpa %s1316, 1
    %1318 = vsyncpa [#allocation7], 1
    %s1319 = scalar_lea.sflag [#allocation7], 1
    %1320 = vsyncpa %s1319, 1
    %1321 = vsyncpa [#allocation10], 1
    %1322 = vsyncpa [#allocation13], 1
    %1323 = vsyncpa [#allocation5], 1
    %s1324 = scalar_lea.sflag [#allocation5], 1
    %1325 = vsyncpa %s1324, 1

</llo_original>
